<compile_context>
chip_gen: v6e
topology: v6e:2x2x1
jax: 0.10.0
libtpu: 0.0.40
codegen_flags: <defaults>
</compile_context>

<pallas_src>
import functools

import jax
import jax.numpy as jnp
from jax import lax
from jax.experimental import pallas as pl
from jax.experimental.pallas import tpu as pltpu


def _round_up(v, m):
    return -(-v // m) * m


# ----------------------------------------------------------------------------
# Kernel A: conv for one (image, row-tile) as a single fused-K matmul
#           + per-tile partial BN statistics.
# ----------------------------------------------------------------------------
def _conv_stats_kernel(x_ref, w_ref, y_ref, stats_ref, *,
                       kh, kw, stride, dilation, tile_h, w_out, k_pad):
    """Grid = (batch, row_tiles).

    x_ref:     (H_pad, W_pad, C_in)   whole padded image (resident across tiles)
    w_ref:     (K_pad, C_out_pad)     flattened conv weights, K = KH*KW*C_in
    y_ref:     (TILE_ROWS, C_out_pad) conv output rows for this (image, tile)
    stats_ref: (8, C_out_pad)         row0 = sum(y), row1 = sum(y*y), rest 0
    """
    t = pl.program_id(1)
    c_in = x_ref.shape[-1]
    c_out_pad = w_ref.shape[-1]
    tile_rows = tile_h * w_out
    hs = (tile_h - 1) * stride + 1        # input-row span per tap for this tile
    ws = (w_out - 1) * stride + 1         # input-col span per tap
    row0 = pl.multiple_of(t * (tile_h * stride), tile_h * stride)

    # Assemble the (TILE_ROWS, K_pad) im2col tile on-chip: one lane-dim concat
    # of the KH*KW shifted slabs (x is read from HBM exactly once; duplication
    # only ever exists in VMEM/vregs).
    slabs = []
    for i in range(kh):                   # static, fully unrolled
        for j in range(kw):
            slab = x_ref[pl.ds(row0 + i * dilation, hs),
                         j * dilation:j * dilation + ws, :]
            if stride > 1:
                # TODO(synk): for stride>1 prefer wrapper-side space-to-depth
                # (stride^2 phases) so in-kernel access stays contiguous.
                slab = slab[::stride, ::stride, :]
            slabs.append(slab)            # (tile_h, w_out, c_in)
    k = kh * kw * c_in
    if k_pad > k:
        slabs.append(jnp.zeros((tile_h, w_out, k_pad - k), x_ref.dtype))
    lhs = jnp.concatenate(slabs, axis=-1).reshape(tile_rows, k_pad)

    # Single MXU pass (K folded), f32 accumulation straight into the store.
    acc = jnp.dot(lhs, w_ref[...], preferred_element_type=jnp.float32)
    y_ref[...] = acc.astype(y_ref.dtype)

    # Per-(image, tile) partial BN stats in a clean (8, 128)-padded tile.
    # (Cross-sublane sums stay on the XLU; move them to a ones-vector matmul
    #  only if a bundle dump shows them on the critical path.)
    s = jnp.sum(acc, axis=0, keepdims=True)
    sq = jnp.sum(acc * acc, axis=0, keepdims=True)
    stats_ref[...] = jnp.concatenate(
        [s, sq, jnp.zeros((6, c_out_pad), jnp.float32)], axis=0)


# ----------------------------------------------------------------------------
# Kernel B (fused): BN affine + channel-pad slice + HWC->CHW transpose.
# ----------------------------------------------------------------------------
def _bn_nchw_kernel(y_ref, ss_ref, o_ref, *, c_out):
    """y_ref: (TILE_ROWS, C_out_pad) f32; ss_ref: (8, C_out_pad) [scale; shift];
    o_ref: (C_out, TILE_ROWS) slice of the final NCHW output."""
    yb = y_ref[...] * ss_ref[0:1, :] + ss_ref[1:2, :]
    o_ref[...] = jnp.transpose(yb)[:c_out, :].astype(o_ref.dtype)


# Fallback kernel B: in-place BN affine (NHWC); slice/transpose done in XLA.
def _bn_apply_kernel(y_ref, ss_ref, o_ref):
    o_ref[...] = y_ref[...] * ss_ref[0:1, :] + ss_ref[1:2, :]


def _pick_tile_h(h_out, w_out, n, c_out_pad, target_bytes=2 << 20):
    """Largest divisor of h_out whose row tile is lane-clean (tile_h*w_out a
    multiple of 128 -> unmasked vst in A and 128-lane stores after the fused
    transpose in B) and keeps the f32 y block ~target_bytes; prefer >= 4 total
    grid steps so small batches still pipeline / use both v7x cores."""
    max_rows = max(128, target_bytes // (c_out_pad * 4))
    cands = [d for d in range(1, h_out + 1)
             if h_out % d == 0 and (d * w_out) % 128 == 0
             and d * w_out <= max_rows]
    if not cands:
        # TODO(synk): halo (pl.Element) row tiling for shapes with no clean
        # divisor; for now fall back to whole-image tiles.
        return h_out
    d = max(cands)
    while n * (h_out // d) < 4:
        smaller = [c for c in cands if c < d]
        if not smaller:
            break
        d = max(smaller)
    return d


@functools.partial(jax.jit,
                   static_argnames=("stride", "padding", "dilation",
                                    "compute_dtype"))
def basic_conv2d(x, weight, gamma, beta, stride=1, padding=0, dilation=1,
                 eps=1e-5, compute_dtype=jnp.float32):
    """Forward of BasicConv2d: BatchNorm2d(Conv2d(x)), no ReLU.

    x:      (N, C_in, H, W)         float32
    weight: (C_out, C_in, KH, KW)   float32 (conv, bias=False)
    gamma, beta: (C_out,)           BatchNorm2d affine params
    """
    n, c_in, h, w = x.shape
    c_out, _, kh, kw = weight.shape
    h_out = (h + 2 * padding - dilation * (kh - 1) - 1) // stride + 1
    w_out = (w + 2 * padding - dilation * (kw - 1) - 1) // stride + 1
    hw = h_out * w_out
    c_out_pad = _round_up(c_out, 128)          # lane-dense channels
    k = kh * kw * c_in
    k_pad = _round_up(k, 128)                  # lane-dense contraction

    tile_h = _pick_tile_h(h_out, w_out, n, c_out_pad)
    n_tiles = h_out // tile_h
    tile_rows = tile_h * w_out

    # NCHW -> NHWC + spatial zero-pad: x's only HBM copy (no HBM im2col).
    x_nhwc = jnp.transpose(x, (0, 2, 3, 1))
    x_pad = jnp.pad(x_nhwc, ((0, 0), (padding, padding),
                             (padding, padding), (0, 0))).astype(compute_dtype)
    hp, wp = x_pad.shape[1], x_pad.shape[2]

    # (C_out, C_in, KH, KW) -> (K_pad, C_out_pad); K ordered (kh, kw, c_in) to
    # match the in-kernel lhs assembly.
    w_flat = jnp.transpose(weight, (2, 3, 1, 0)).reshape(k, c_out)
    w_flat = jnp.pad(w_flat, ((0, k_pad - k),
                              (0, c_out_pad - c_out))).astype(compute_dtype)

    # Explicit VMEM budget: double-buffered x/y/stats blocks + resident
    # weights + the in-kernel lhs working set, with headroom (v7x: 64 MiB
    # physical, 32 MiB scoped default).
    itemsize = jnp.dtype(compute_dtype).itemsize
    x_blk = hp * _round_up(wp, 8) * _round_up(c_in, 128) * itemsize
    y_blk = _round_up(tile_rows, 8) * c_out_pad * 4
    st_blk = 8 * c_out_pad * 4
    w_blk = _round_up(k_pad, 8) * c_out_pad * itemsize
    lhs_blk = _round_up(tile_rows, 8) * k_pad * itemsize
    need = 2 * x_blk + w_blk + 2 * (y_blk + st_blk) + lhs_blk + 2 * y_blk
    vmem_limit = int(min(48 << 20, max(3 * need, 16 << 20)))
    cparams = pltpu.CompilerParams(
        dimension_semantics=("parallel", "parallel"),
        vmem_limit_bytes=vmem_limit)

    kernel_a = functools.partial(_conv_stats_kernel, kh=kh, kw=kw,
                                 stride=stride, dilation=dilation,
                                 tile_h=tile_h, w_out=w_out, k_pad=k_pad)

    # --- Kernel A: fused-K conv + per-tile partial channel stats -------------
    y, stats = pl.pallas_call(
        kernel_a,
        out_shape=(
            jax.ShapeDtypeStruct((n, hw, c_out_pad), jnp.float32),
            jax.ShapeDtypeStruct((n, n_tiles, 8, c_out_pad), jnp.float32),
        ),
        grid_spec=pltpu.PrefetchScalarGridSpec(
            num_scalar_prefetch=0,
            grid=(n, n_tiles),
            in_specs=[
                # whole padded image, resident across the row-tile axis
                pl.BlockSpec((None, hp, wp, c_in), lambda b, t: (b, 0, 0, 0)),
                # resident flattened weights
                pl.BlockSpec((k_pad, c_out_pad), lambda b, t: (0, 0)),
            ],
            out_specs=[
                pl.BlockSpec((None, tile_rows, c_out_pad),
                             lambda b, t: (b, t, 0)),
                pl.BlockSpec((None, None, 8, c_out_pad),
                             lambda b, t: (b, t, 0, 0)),
            ],
        ),
        compiler_params=cparams,
    )(x_pad, w_flat)

    # --- tiny glue: batch stats -> packed BN scale/shift (8, C_out_pad) ------
    # Padded channels have zero sums -> scale = shift = 0 there (gamma is
    # zero-padded), so nothing leaks past the in-kernel channel slice.
    # TODO(synk): single-pass E[y^2]-E[y]^2 variance; add Welford if
    # activations ever have |mean|^2 >> var.
    stats_tot = jnp.sum(stats, axis=(0, 1))       # (8, C_out_pad)
    count = jnp.float32(n * hw)
    mean = stats_tot[0] / count
    var = stats_tot[1] / count - mean * mean      # biased var (PyTorch BN norm)
    inv_std = lax.rsqrt(var + eps)
    gamma_p = jnp.pad(gamma.astype(jnp.float32), (0, c_out_pad - c_out))
    beta_p = jnp.pad(beta.astype(jnp.float32), (0, c_out_pad - c_out))
    scale = gamma_p * inv_std
    shift = beta_p - mean * scale
    ss = jnp.concatenate([scale[None], shift[None],
                          jnp.zeros((6, c_out_pad), jnp.float32)], axis=0)

    if tile_rows % 128 == 0:
        # --- Kernel B (fused): BN affine + pad-slice + HWC->CHW transpose ----
        out3 = pl.pallas_call(
            functools.partial(_bn_nchw_kernel, c_out=c_out),
            out_shape=jax.ShapeDtypeStruct((n, c_out, hw), x.dtype),
            grid_spec=pltpu.PrefetchScalarGridSpec(
                num_scalar_prefetch=0,
                grid=(n, n_tiles),
                in_specs=[
                    pl.BlockSpec((None, tile_rows, c_out_pad),
                                 lambda b, t: (b, t, 0)),
                    pl.BlockSpec((8, c_out_pad), lambda b, t: (0, 0)),
                ],
                out_specs=pl.BlockSpec((None, c_out, tile_rows),
                                       lambda b, t: (b, 0, t)),
            ),
            compiler_params=cparams,
        )(y, ss)
        # (N, C_out, HW) -> (N, C_out, H_out, W_out): free metadata reshape.
        return out3.reshape(n, c_out, h_out, w_out)

    # --- Fallback (row tile not 128-lane clean): BN in place, XLA epilogue ---
    y_bn = pl.pallas_call(
        _bn_apply_kernel,
        out_shape=jax.ShapeDtypeStruct((n, hw, c_out_pad), jnp.float32),
        grid_spec=pltpu.PrefetchScalarGridSpec(
            num_scalar_prefetch=0,
            grid=(n, n_tiles),
            in_specs=[
                pl.BlockSpec((None, tile_rows, c_out_pad),
                             lambda b, t: (b, t, 0)),
                pl.BlockSpec((8, c_out_pad), lambda b, t: (0, 0)),
            ],
            out_specs=pl.BlockSpec((None, tile_rows, c_out_pad),
                                   lambda b, t: (b, t, 0)),
        ),
        input_output_aliases={0: 0},
        compiler_params=cparams,
    )(y, ss)
    out = y_bn[:, :, :c_out].reshape(n, h_out, w_out, c_out)
    return jnp.transpose(out, (0, 3, 1, 2))


def _reference(x, weight, gamma, beta, stride, padding, dilation, eps=1e-5):
    y = lax.conv_general_dilated(
        x, weight, window_strides=(stride, stride),
        padding=((padding, padding), (padding, padding)),
        rhs_dilation=(dilation, dilation),
        dimension_numbers=("NCHW", "OIHW", "NCHW"))
    mean = jnp.mean(y, axis=(0, 2, 3), keepdims=True)
    var = jnp.mean((y - mean) ** 2, axis=(0, 2, 3), keepdims=True)
    y = (y - mean) * lax.rsqrt(var + eps)
    return y * gamma.reshape(1, -1, 1, 1) + beta.reshape(1, -1, 1, 1)


if __name__ == "__main__":
    # BasicConv2d(in_planes=4, out_planes=8, kernel_size=3, padding=1)
    N, C_IN, H, W = 2, 4, 16, 16
    C_OUT, KH, KW = 8, 3, 3
    STRIDE, PAD, DIL = 1, 1, 1

    key = jax.random.PRNGKey(0)
    kx, kw_ = jax.random.split(key)
    x = jax.random.normal(kx, (N, C_IN, H, W), dtype=jnp.float32)

    # kaiming_normal_(mode='fan_in', nonlinearity='relu'): std = sqrt(2/fan_in)
    fan_in = C_IN * KH * KW
    weight = jax.random.normal(kw_, (C_OUT, C_IN, KH, KW), dtype=jnp.float32) \
             * jnp.sqrt(2.0 / fan_in)
    gamma = jnp.ones((C_OUT,), dtype=jnp.float32)   # BatchNorm2d weight init
    beta = jnp.zeros((C_OUT,), dtype=jnp.float32)   # BatchNorm2d bias init

    out = basic_conv2d(x, weight, gamma, beta,
                       stride=STRIDE, padding=PAD, dilation=DIL)
    out = jax.block_until_ready(out)

    ref = _reference(x, weight, gamma, beta, STRIDE, PAD, DIL)
    assert out.shape == (N, C_OUT, H, W)
    assert jnp.allclose(out, ref, atol=1e-3, rtol=1e-3), \
        float(jnp.max(jnp.abs(out - ref)))

    print("KERNEL_OK")
</pallas_src>

<mosaic_0001>
module attributes {stable_mosaic.version = 11 : i64} {
  func.func @_conv_stats_kernel(%arg0: i32, %arg1: i32, %arg2: memref<1x18x18x4xf32, #tpu.memory_space<vmem>>, %arg3: memref<128x128xf32, #tpu.memory_space<vmem>>, %arg4: memref<1x128x128xf32, #tpu.memory_space<vmem>>, %arg5: memref<1x1x8x128xf32, #tpu.memory_space<vmem>>) attributes {dimension_semantics = [#tpu.dimension_semantics<parallel>, #tpu.dimension_semantics<parallel>], iteration_bounds = array<i64: 2, 2>, scalar_prefetch = 0 : i64, scratch_operands = 0 : i64, tpu.core_type = #tpu.core_type<tc>, window_params = [{transform_indices = @transform_0, window_bounds = array<i64: 1, 18, 18, 4>}, {pipeline_mode = #tpu.pipeline_mode<synchronous>, transform_indices = @transform_1, window_bounds = array<i64: 128, 128>}, {transform_indices = @transform_2, window_bounds = array<i64: 1, 128, 128>}, {transform_indices = @transform_3, window_bounds = array<i64: 1, 1, 8, 128>}]} {
    %c8_i32 = arith.constant 8 : i32
    %0 = arith.muli %arg1, %c8_i32 : i32
    %1 = tpu.assume_multiple %0, 8 : i32
    %c0_i32 = arith.constant 0 : i32
    %2 = arith.addi %1, %c0_i32 : i32
    %c0 = arith.constant 0 : index
    %3 = arith.index_cast %2 : i32 to index
    %c0_0 = arith.constant 0 : index
    %c0_1 = arith.constant 0 : index
    %4 = vector.load %arg2[%c0, %3, %c0_0, %c0_1] : memref<1x18x18x4xf32, #tpu.memory_space<vmem>>, vector<1x8x16x4xf32>
    %5 = vector.shape_cast %4 : vector<1x8x16x4xf32> to vector<8x16x4xf32>
    %c0_i32_2 = arith.constant 0 : i32
    %6 = arith.addi %1, %c0_i32_2 : i32
    %c0_3 = arith.constant 0 : index
    %7 = arith.index_cast %6 : i32 to index
    %c1 = arith.constant 1 : index
    %c0_4 = arith.constant 0 : index
    %8 = vector.load %arg2[%c0_3, %7, %c1, %c0_4] : memref<1x18x18x4xf32, #tpu.memory_space<vmem>>, vector<1x8x16x4xf32>
    %9 = vector.shape_cast %8 : vector<1x8x16x4xf32> to vector<8x16x4xf32>
    %c0_i32_5 = arith.constant 0 : i32
    %10 = arith.addi %1, %c0_i32_5 : i32
    %c0_6 = arith.constant 0 : index
    %11 = arith.index_cast %10 : i32 to index
    %c2 = arith.constant 2 : index
    %c0_7 = arith.constant 0 : index
    %12 = vector.load %arg2[%c0_6, %11, %c2, %c0_7] : memref<1x18x18x4xf32, #tpu.memory_space<vmem>>, vector<1x8x16x4xf32>
    %13 = vector.shape_cast %12 : vector<1x8x16x4xf32> to vector<8x16x4xf32>
    %c1_i32 = arith.constant 1 : i32
    %14 = arith.addi %1, %c1_i32 : i32
    %c0_8 = arith.constant 0 : index
    %15 = arith.index_cast %14 : i32 to index
    %c0_9 = arith.constant 0 : index
    %c0_10 = arith.constant 0 : index
    %16 = vector.load %arg2[%c0_8, %15, %c0_9, %c0_10] : memref<1x18x18x4xf32, #tpu.memory_space<vmem>>, vector<1x8x16x4xf32>
    %17 = vector.shape_cast %16 : vector<1x8x16x4xf32> to vector<8x16x4xf32>
    %c1_i32_11 = arith.constant 1 : i32
    %18 = arith.addi %1, %c1_i32_11 : i32
    %c0_12 = arith.constant 0 : index
    %19 = arith.index_cast %18 : i32 to index
    %c1_13 = arith.constant 1 : index
    %c0_14 = arith.constant 0 : index
    %20 = vector.load %arg2[%c0_12, %19, %c1_13, %c0_14] : memref<1x18x18x4xf32, #tpu.memory_space<vmem>>, vector<1x8x16x4xf32>
    %21 = vector.shape_cast %20 : vector<1x8x16x4xf32> to vector<8x16x4xf32>
    %c1_i32_15 = arith.constant 1 : i32
    %22 = arith.addi %1, %c1_i32_15 : i32
    %c0_16 = arith.constant 0 : index
    %23 = arith.index_cast %22 : i32 to index
    %c2_17 = arith.constant 2 : index
    %c0_18 = arith.constant 0 : index
    %24 = vector.load %arg2[%c0_16, %23, %c2_17, %c0_18] : memref<1x18x18x4xf32, #tpu.memory_space<vmem>>, vector<1x8x16x4xf32>
    %25 = vector.shape_cast %24 : vector<1x8x16x4xf32> to vector<8x16x4xf32>
    %c2_i32 = arith.constant 2 : i32
    %26 = arith.addi %1, %c2_i32 : i32
    %c0_19 = arith.constant 0 : index
    %27 = arith.index_cast %26 : i32 to index
    %c0_20 = arith.constant 0 : index
    %c0_21 = arith.constant 0 : index
    %28 = vector.load %arg2[%c0_19, %27, %c0_20, %c0_21] : memref<1x18x18x4xf32, #tpu.memory_space<vmem>>, vector<1x8x16x4xf32>
    %29 = vector.shape_cast %28 : vector<1x8x16x4xf32> to vector<8x16x4xf32>
    %c2_i32_22 = arith.constant 2 : i32
    %30 = arith.addi %1, %c2_i32_22 : i32
    %c0_23 = arith.constant 0 : index
    %31 = arith.index_cast %30 : i32 to index
    %c1_24 = arith.constant 1 : index
    %c0_25 = arith.constant 0 : index
    %32 = vector.load %arg2[%c0_23, %31, %c1_24, %c0_25] : memref<1x18x18x4xf32, #tpu.memory_space<vmem>>, vector<1x8x16x4xf32>
    %33 = vector.shape_cast %32 : vector<1x8x16x4xf32> to vector<8x16x4xf32>
    %c2_i32_26 = arith.constant 2 : i32
    %34 = arith.addi %1, %c2_i32_26 : i32
    %c0_27 = arith.constant 0 : index
    %35 = arith.index_cast %34 : i32 to index
    %c2_28 = arith.constant 2 : index
    %c0_29 = arith.constant 0 : index
    %36 = vector.load %arg2[%c0_27, %35, %c2_28, %c0_29] : memref<1x18x18x4xf32, #tpu.memory_space<vmem>>, vector<1x8x16x4xf32>
    %37 = vector.shape_cast %36 : vector<1x8x16x4xf32> to vector<8x16x4xf32>
    %cst = arith.constant 0.000000e+00 : f32
    %38 = vector.broadcast %cst : f32 to vector<8x16x92xf32>
    %39 = tpu.concatenate %5, %9, %13, %17, %21, %25, %29, %33, %37, %38 in 2 : vector<8x16x4xf32>, vector<8x16x4xf32>, vector<8x16x4xf32>, vector<8x16x4xf32>, vector<8x16x4xf32>, vector<8x16x4xf32>, vector<8x16x4xf32>, vector<8x16x4xf32>, vector<8x16x4xf32>, vector<8x16x92xf32> -> vector<8x16x128xf32>
    %40 = vector.shape_cast %39 : vector<8x16x128xf32> to vector<128x128xf32>
    %c0_30 = arith.constant 0 : index
    %c0_31 = arith.constant 0 : index
    %41 = vector.load %arg3[%c0_30, %c0_31] : memref<128x128xf32, #tpu.memory_space<vmem>>, vector<128x128xf32>
    %cst_32 = arith.constant dense<0.000000e+00> : vector<128x128xf32>
    %42 = tpu.matmul %40, %41, %cst_32 {dimension_numbers = #tpu.dot_dimension_numbers<[1], [0], [0], [1], [0, 0, 1, 1], [], []>} : vector<128x128xf32>, vector<128x128xf32>, vector<128x128xf32> -> vector<128x128xf32>
    %c0_33 = arith.constant 0 : index
    %c0_34 = arith.constant 0 : index
    %c0_35 = arith.constant 0 : index
    %43 = vector.load %arg4[%c0_33, %c0_34, %c0_35] : memref<1x128x128xf32, #tpu.memory_space<vmem>>, vector<1x128x128xf32>
    %44 = vector.shape_cast %43 : vector<1x128x128xf32> to vector<128x128xf32>
    %45 = vector.shape_cast %42 : vector<128x128xf32> to vector<1x128x128xf32>
    tpu.vector_store %arg4[%c0_33, %c0_34, %c0_35], %45 {strides = array<i32>} : memref<1x128x128xf32, #tpu.memory_space<vmem>>, vector<1x128x128xf32>,
    %cst_36 = arith.constant dense<0.000000e+00> : vector<128xf32>
    %46 = vector.multi_reduction <add>, %42, %cst_36 [0] : vector<128x128xf32> to vector<128xf32>
    %47 = vector.shape_cast %46 : vector<128xf32> to vector<1x128xf32>
    %48 = arith.mulf %42, %42 : vector<128x128xf32>
    %cst_37 = arith.constant dense<0.000000e+00> : vector<128xf32>
    %49 = vector.multi_reduction <add>, %48, %cst_37 [0] : vector<128x128xf32> to vector<128xf32>
    %50 = vector.shape_cast %49 : vector<128xf32> to vector<1x128xf32>
    %cst_38 = arith.constant 0.000000e+00 : f32
    %51 = vector.broadcast %cst_38 : f32 to vector<6x128xf32>
    %52 = tpu.concatenate %47, %50, %51 in 0 : vector<1x128xf32>, vector<1x128xf32>, vector<6x128xf32> -> vector<8x128xf32>
    %c0_39 = arith.constant 0 : index
    %c0_40 = arith.constant 0 : index
    %c0_41 = arith.constant 0 : index
    %c0_42 = arith.constant 0 : index
    %53 = vector.load %arg5[%c0_39, %c0_40, %c0_41, %c0_42] : memref<1x1x8x128xf32, #tpu.memory_space<vmem>>, vector<1x1x8x128xf32>
    %54 = vector.shape_cast %53 : vector<1x1x8x128xf32> to vector<8x128xf32>
    %55 = vector.shape_cast %52 : vector<8x128xf32> to vector<1x1x8x128xf32>
    tpu.vector_store %arg5[%c0_39, %c0_40, %c0_41, %c0_42], %55 {strides = array<i32>} : memref<1x1x8x128xf32, #tpu.memory_space<vmem>>, vector<1x1x8x128xf32>,
    return
  }
  func.func @transform_0(%arg0: i32, %arg1: i32) -> (i32, i32, i32, i32) {
    %c0_i32 = arith.constant 0 : i32
    %c0_i32_0 = arith.constant 0 : i32
    %c0_i32_1 = arith.constant 0 : i32
    %c0_i32_2 = arith.constant 0 : i32
    return %arg0, %c0_i32, %c0_i32_0, %c0_i32_1 : i32, i32, i32, i32
  }
  func.func @transform_1(%arg0: i32, %arg1: i32) -> (i32, i32) {
    %c0_i32 = arith.constant 0 : i32
    %c0_i32_0 = arith.constant 0 : i32
    %c0_i32_1 = arith.constant 0 : i32
    return %c0_i32, %c0_i32_0 : i32, i32
  }
  func.func @transform_2(%arg0: i32, %arg1: i32) -> (i32, i32, i32) {
    %c0_i32 = arith.constant 0 : i32
    %c0_i32_0 = arith.constant 0 : i32
    return %arg0, %arg1, %c0_i32 : i32, i32, i32
  }
  func.func @transform_3(%arg0: i32, %arg1: i32) -> (i32, i32, i32, i32) {
    %c0_i32 = arith.constant 0 : i32
    %c0_i32_0 = arith.constant 0 : i32
    %c0_i32_1 = arith.constant 0 : i32
    return %arg0, %arg1, %c0_i32, %c0_i32_0 : i32, i32, i32, i32
  }
}

module attributes {stable_mosaic.version = 11 : i64} {
  func.func @_bn_nchw_kernel(%arg0: i32, %arg1: i32, %arg2: memref<1x128x128xf32, #tpu.memory_space<vmem>>, %arg3: memref<8x128xf32, #tpu.memory_space<vmem>>, %arg4: memref<1x8x128xf32, #tpu.memory_space<vmem>>) attributes {dimension_semantics = [#tpu.dimension_semantics<parallel>, #tpu.dimension_semantics<parallel>], iteration_bounds = array<i64: 2, 2>, scalar_prefetch = 0 : i64, scratch_operands = 0 : i64, tpu.core_type = #tpu.core_type<tc>, window_params = [{transform_indices = @transform_0, window_bounds = array<i64: 1, 128, 128>}, {pipeline_mode = #tpu.pipeline_mode<synchronous>, transform_indices = @transform_1, window_bounds = array<i64: 8, 128>}, {transform_indices = @transform_2, window_bounds = array<i64: 1, 8, 128>}]} {
    %c0 = arith.constant 0 : index
    %c0_0 = arith.constant 0 : index
    %c0_1 = arith.constant 0 : index
    %0 = vector.load %arg2[%c0, %c0_0, %c0_1] : memref<1x128x128xf32, #tpu.memory_space<vmem>>, vector<1x128x128xf32>
    %1 = vector.shape_cast %0 : vector<1x128x128xf32> to vector<128x128xf32>
    %c0_2 = arith.constant 0 : index
    %c0_3 = arith.constant 0 : index
    %2 = vector.load %arg3[%c0_2, %c0_3] : memref<8x128xf32, #tpu.memory_space<vmem>>, vector<1x128xf32>
    %3 = vector.broadcast %2 : vector<1x128xf32> to vector<128x128xf32>
    %4 = arith.mulf %1, %3 : vector<128x128xf32>
    %c1 = arith.constant 1 : index
    %c0_4 = arith.constant 0 : index
    %5 = vector.load %arg3[%c1, %c0_4] : memref<8x128xf32, #tpu.memory_space<vmem>>, vector<1x128xf32>
    %6 = vector.broadcast %5 : vector<1x128xf32> to vector<128x128xf32>
    %7 = arith.addf %4, %6 : vector<128x128xf32>
    %8 = tpu.transpose %7, [1, 0] : vector<128x128xf32> -> vector<128x128xf32>
    %9 = vector.extract_strided_slice %8 {offsets = [0, 0], sizes = [8, 128], strides = [1, 1]} : vector<128x128xf32> to vector<8x128xf32>
    %c0_5 = arith.constant 0 : index
    %c0_6 = arith.constant 0 : index
    %c0_7 = arith.constant 0 : index
    %10 = vector.load %arg4[%c0_5, %c0_6, %c0_7] : memref<1x8x128xf32, #tpu.memory_space<vmem>>, vector<1x8x128xf32>
    %11 = vector.shape_cast %10 : vector<1x8x128xf32> to vector<8x128xf32>
    %12 = vector.shape_cast %9 : vector<8x128xf32> to vector<1x8x128xf32>
    tpu.vector_store %arg4[%c0_5, %c0_6, %c0_7], %12 {strides = array<i32>} : memref<1x8x128xf32, #tpu.memory_space<vmem>>, vector<1x8x128xf32>,
    return
  }
  func.func @transform_0(%arg0: i32, %arg1: i32) -> (i32, i32, i32) {
    %c0_i32 = arith.constant 0 : i32
    %c0_i32_0 = arith.constant 0 : i32
    return %arg0, %arg1, %c0_i32 : i32, i32, i32
  }
  func.func @transform_1(%arg0: i32, %arg1: i32) -> (i32, i32) {
    %c0_i32 = arith.constant 0 : i32
    %c0_i32_0 = arith.constant 0 : i32
    %c0_i32_1 = arith.constant 0 : i32
    return %c0_i32, %c0_i32_0 : i32, i32
  }
  func.func @transform_2(%arg0: i32, %arg1: i32) -> (i32, i32, i32) {
    %c0_i32 = arith.constant 0 : i32
    %c0_i32_0 = arith.constant 0 : i32
    return %arg0, %c0_i32, %arg1 : i32, i32, i32
  }
}

</mosaic_0001>

<llo_original>
// kernel: basic_conv2d.3
$region0: #{basic_conv2d.3}
  #allocation0 [shape = 'u32[]', space=smem, size = 0x4, offset = 0x4, fixed_abs, tag = 'smem constant byte address 0x4 - core index']
  #allocation1 [shape = 'u32[144,128]{1,0:T(1,128)}', space=vmem, size = 0x12000, scoped, tag = 'internal scratch']
  %s0 = inlined_call_operand.vmem [shape: f32[2,256,128], index: 0, kind: input, shape index: {}]
  %s1 = inlined_call_operand.vmem [shape: f32[8,128], index: 1, kind: input, shape index: {}]
  %s2 = inlined_call_operand.vmem [shape: f32[2,8,256], index: 2, kind: output, shape index: {}]
  %s3 = sld [smem:[#allocation0]]
  $region41: #{basic_conv2d.3} parent=0
    _
  %s5 = ssub.s32 1, %s3
  %s6 = scalar_select 0, %s5, %s3
  loop: start=0, step=1, limit=6
  $region2: #{basic_conv2d.3} parent=0 // loop_pre_header
    _
  $region3: #{basic_conv2d.3} parent=0 // loop_header
    %s8 = sphi 0, %s12
    %p9 = scmp.ge.s32.totalorder %s8, 6
    %s15 = sphi 0, %s27
    %s16 = sphi 0, %s23
    %s17 = sphi 0, %s15
    %s18 = sphi 0, %s16
    %s19 = sphi 0, %s17
    %s20 = sphi 0, %s18
    %s32 = sphi 0, %s34
    %s35 = sphi 0, %s32
    %s36 = sphi 0, %s35
    %s52 = sphi 0, %s36
    %s56 = sphi 0, %s56
    %s58 = sphi 0, %s56
    %s59 = sphi 0, %s58
    %s73 = sphi 0, %s59
    %s81 = sphi 0, %s83
    %s84 = sphi 0, %s81
    %s85 = sphi 0, %s84
    %s101 = sphi 0, %s85
  $region4: #{basic_conv2d.3} parent=0 // loop_header_branch
    %11 = sbr.rel (%p9) target = $region8
  $region5: #{basic_conv2d.3} parent=0 // loop_body
    %s13 = ssub.s32 %s8, 1
    %s14 = ssub.s32 %s8, 2
    %s21 = sadd.s32 1, %s16
    %p22 = scmp.ge.s32.totalorder %s21, 2
    %s23 = scalar_select %p22, 0, %s21
    %s24 = sadd.s32 1, %s15
    %s25 = scalar_select %p22, %s24, %s15
    %p26 = scmp.ge.s32.totalorder %s25, 2
    %s27 = scalar_select %p26, 0, %s25
    %s28 = ssub.s32 %s15, %s27
    %s29 = ssub.s32 %s16, %s23
    %s30 = sor.u32 %s28, %s29
    %p31 = scmp.eq.s32.totalorder %s30, 0
    %s33 = sadd.s32 %s32, 1
    %s34 = scalar_select %p31, %s32, %s33
    %p37 = pneg %p31
    %p38 = scmp.eq.s32.totalorder %s8, 3
    %p39 = por %p37, %p38
    %p40 = scmp.ne.s32.totalorder %s32, %s35
    %p41 = scmp.eq.s32.totalorder %s8, 0
    %p42 = por %p40, %p41
    %p43 = scmp.ne.s32.totalorder %s32, %s35
    %p44 = scmp.eq.s32.totalorder %s13, 3
    %p45 = por %p43, %p44
    %p46 = scmp.ne.s32.totalorder %s35, %s36
    %p47 = scmp.eq.s32.totalorder %s13, 0
    %p48 = por %p46, %p47
    %p49 = scmp.ne.s32.totalorder %s35, %s36
    %p50 = scmp.eq.s32.totalorder %s14, 3
    %p51 = por %p49, %p50
    %p53 = scmp.ne.s32.totalorder %s36, %s52
    %p54 = scmp.eq.s32.totalorder %s14, 0
    %p55 = por %p53, %p54
    %s57 = sadd.s32 %s56, 1
    %p60 = scmp.eq.s32.totalorder %s8, 3
    %p61 = scmp.ne.s32.totalorder %s56, %s58
    %p62 = scmp.eq.s32.totalorder %s8, 0
    %p63 = por %p61, %p62
    %p64 = scmp.ne.s32.totalorder %s56, %s58
    %p65 = scmp.eq.s32.totalorder %s13, 3
    %p66 = por %p64, %p65
    %p67 = scmp.ne.s32.totalorder %s58, %s59
    %p68 = scmp.eq.s32.totalorder %s13, 0
    %p69 = por %p67, %p68
    %p70 = scmp.ne.s32.totalorder %s58, %s59
    %p71 = scmp.eq.s32.totalorder %s14, 3
    %p72 = por %p70, %p71
    %p74 = scmp.ne.s32.totalorder %s59, %s73
    %p75 = scmp.eq.s32.totalorder %s14, 0
    %p76 = por %p74, %p75
    %s77 = ssub.s32 %s15, %s27
    %s78 = ssub.s32 %s16, %s23
    %s79 = sor.u32 %s77, %s78
    %p80 = scmp.eq.s32.totalorder %s79, 0
    %s82 = sadd.s32 %s81, 1
    %s83 = scalar_select %p80, %s81, %s82
    %p86 = pneg %p80
    %p87 = scmp.eq.s32.totalorder %s8, 3
    %p88 = por %p86, %p87
    %p89 = scmp.ne.s32.totalorder %s81, %s84
    %p90 = scmp.eq.s32.totalorder %s8, 0
    %p91 = por %p89, %p90
    %p92 = scmp.ne.s32.totalorder %s81, %s84
    %p93 = scmp.eq.s32.totalorder %s13, 3
    %p94 = por %p92, %p93
    %p95 = scmp.ne.s32.totalorder %s84, %s85
    %p96 = scmp.eq.s32.totalorder %s13, 0
    %p97 = por %p95, %p96
    %p98 = scmp.ne.s32.totalorder %s84, %s85
    %p99 = scmp.eq.s32.totalorder %s14, 3
    %p100 = por %p98, %p99
    %p102 = scmp.ne.s32.totalorder %s85, %s101
    %p103 = scmp.eq.s32.totalorder %s14, 0
    %p104 = por %p102, %p103
    %p105 = scmp.le.s32.totalorder 1, %s8
    %p106 = scmp.lt.s32.totalorder %s8, 5
    %p107 = pnand %p105, %p106
    %p108 = pneg %p107
    // Predicated region
    $region9: #{basic_conv2d.3} parent=5 // pred_check
      _
    $region10: #{basic_conv2d.3} parent=5 // pred_check_branch
      %110 = sbr.rel (%p107) target = $region12
    $region11: #{basic_conv2d.3} parent=5 // pred_region
      %s111 = ssub.s32 %s8, 1
      // Predicated region
      $region13: #{basic_conv2d.3} parent=11 // pred_check
        %p112 = pneg %p69
      $region14: #{basic_conv2d.3} parent=11 // pred_check_branch
        %114 = sbr.rel (%p112) target = $region16
      $region15: #{basic_conv2d.3} parent=11 // pred_region
        _
      $region16: #{basic_conv2d.3} parent=11 // pred_fallthru
        _
    $region12: #{basic_conv2d.3} parent=5 // pred_fallthru
      _
    %p115 = scmp.lt.s32.totalorder %s8, 4
    // Predicated region
    $region17: #{basic_conv2d.3} parent=5 // pred_check
      %p116 = pneg %p115
    $region18: #{basic_conv2d.3} parent=5 // pred_check_branch
      %118 = sbr.rel (%p116) target = $region20
    $region19: #{basic_conv2d.3} parent=5 // pred_region
      // Predicated region
      $region21: #{basic_conv2d.3} parent=19 // pred_check
        %p119 = pneg %p42
      $region22: #{basic_conv2d.3} parent=19 // pred_check_branch
        %121 = sbr.rel (%p119) target = $region24
      $region23: #{basic_conv2d.3} parent=19 // pred_region
        %s122 = smul.u32 16, %s16
        %p123 = scmp.lt.s32.totalorder %s15, 1
        %s124 = scalar_select %p123, %s15, 1
        %p125 = scmp.lt.s32.totalorder %s122, 31
        %s126 = scalar_select %p125, %s122, 31
        %s127 = smul.addr %s124, 32
        %s128 = sadd.s32 %s126, %s127
        %s129 = smul.addr %s128, 8
        %s130 = scalar_lea.vmem %s0, %s129
        %s131 = smul.u32 16, %s16
      $region24: #{basic_conv2d.3} parent=19 // pred_fallthru
        _
    $region20: #{basic_conv2d.3} parent=5 // pred_fallthru
      _
    %p132 = scmp.le.s32.totalorder 1, %s8
    %p133 = scmp.lt.s32.totalorder %s8, 5
    %p134 = pnand %p132, %p133
    %p135 = pneg %p134
    // Predicated region
    $region25: #{basic_conv2d.3} parent=5 // pred_check
      _
    $region26: #{basic_conv2d.3} parent=5 // pred_check_branch
      %137 = sbr.rel (%p134) target = $region28
    $region27: #{basic_conv2d.3} parent=5 // pred_region
      %s138 = ssub.s32 %s8, 1
      %s139 = smul.u32 16, %s18
      %p140 = scmp.lt.s32.totalorder %s17, 1
      %s141 = scalar_select %p140, %s17, 1
      %p142 = scmp.lt.s32.totalorder %s139, 31
      %s143 = scalar_select %p142, %s139, 31
      %s144 = smul.addr %s141, 32
      %s145 = sadd.s32 %s143, %s144
      %s146 = smul.addr %s145, 8
      %s147 = scalar_lea.vmem %s0, %s146
      %p148 = pneg %p48
      %p149 = pneg %p45
      %p150 = pneg %p69
      %p151 = pneg %p66
      %p152 = pneg %p97
      %p153 = pneg %p94
      %p154 = scmp.lt.s32.totalorder %s17, 1
      %s155 = scalar_select %p154, %s17, 1
      %p156 = scmp.lt.s32.totalorder %s18, 1
      %s157 = scalar_select %p156, %s18, 1
      %s158 = smul.addr %s155, 2
      %s159 = sadd.s32 %s157, %s158
      %s160 = smul.addr %s159, 8
      %s161 = scalar_lea.vmem %s2, %s160
      %s162 = smul.u32 16, %s18
      %p163 = scmp.lt.s32.totalorder %s17, 1
      %s164 = scalar_select %p163, %s17, 1
      %p165 = scmp.lt.s32.totalorder %s162, 31
      %s166 = scalar_select %p165, %s162, 31
      %s167 = smul.addr %s164, 32
      %s168 = sadd.s32 %s166, %s167
      %s169 = smul.addr %s168, 8
      %s170 = scalar_lea.vmem %s0, %s169
      %s171 = smul.u32 16, %s18
      %p172 = scmp.lt.s32.totalorder %s17, 1
      %s173 = scalar_select %p172, %s17, 1
      %p174 = scmp.lt.s32.totalorder %s18, 1
      %s175 = scalar_select %p174, %s18, 1
      %s176 = smul.addr %s173, 2
      %s177 = sadd.s32 %s175, %s176
      %s178 = smul.addr %s177, 8
      %s179 = scalar_lea.vmem %s2, %s178
      %v180 = vld [vmem:[%s170] sm:$0xff]
      %v181 = vld [vmem:[%s170 + $0x8] sm:$0xff]
      %v182 = vld [vmem:[%s170 + $0x10] sm:$0xff]
      %v183 = vld [vmem:[%s170 + $0x18] sm:$0xff]
      %v184 = vld [vmem:[%s170 + $0x20] sm:$0xff]
      %v185 = vld [vmem:[%s170 + $0x28] sm:$0xff]
      %v186 = vld [vmem:[%s170 + $0x30] sm:$0xff]
      %v187 = vld [vmem:[%s170 + $0x38] sm:$0xff]
      %v188 = vld [vmem:[%s170 + $0x40] sm:$0xff]
      %v189 = vld [vmem:[%s170 + $0x48] sm:$0xff]
      %v190 = vld [vmem:[%s170 + $0x50] sm:$0xff]
      %v191 = vld [vmem:[%s170 + $0x58] sm:$0xff]
      %v192 = vld [vmem:[%s170 + $0x60] sm:$0xff]
      %v193 = vld [vmem:[%s170 + $0x68] sm:$0xff]
      %v194 = vld [vmem:[%s170 + $0x70] sm:$0xff]
      %v195 = vld [vmem:[%s170 + $0x78] sm:$0xff]
      %v196 = vld [vmem:[%s1] sm:$0x1]
      %v197 = vlaneseq
      %v198 = vshrl.u32 %v197, 7
      %v199 = vsub.s32 0, %v198
      %v200 = vrot.slane %v196, %v199
      %v201 = vmul.f32 %v180, %v200
      %v202 = vmul.f32 %v181, %v200
      %v203 = vmul.f32 %v182, %v200
      %v204 = vmul.f32 %v183, %v200
      %v205 = vmul.f32 %v184, %v200
      %v206 = vmul.f32 %v185, %v200
      %v207 = vmul.f32 %v186, %v200
      %v208 = vmul.f32 %v187, %v200
      %v209 = vmul.f32 %v188, %v200
      %v210 = vmul.f32 %v189, %v200
      %v211 = vmul.f32 %v190, %v200
      %v212 = vmul.f32 %v191, %v200
      %v213 = vmul.f32 %v192, %v200
      %v214 = vmul.f32 %v193, %v200
      %v215 = vmul.f32 %v194, %v200
      %v216 = vmul.f32 %v195, %v200
      %v217 = vld [vmem:[%s1 + $0x1] sm:$0x1]
      %v218 = vlaneseq
      %v219 = vshrl.u32 %v218, 7
      %v220 = vsub.s32 0, %v219
      %v221 = vrot.slane %v217, %v220
      %v222 = vadd.f32 %v201, %v221
      %v223 = vadd.f32 %v202, %v221
      %v224 = vadd.f32 %v203, %v221
      %v225 = vadd.f32 %v204, %v221
      %v226 = vadd.f32 %v205, %v221
      %v227 = vadd.f32 %v206, %v221
      %v228 = vadd.f32 %v207, %v221
      %v229 = vadd.f32 %v208, %v221
      %v230 = vadd.f32 %v209, %v221
      %v231 = vadd.f32 %v210, %v221
      %v232 = vadd.f32 %v211, %v221
      %v233 = vadd.f32 %v212, %v221
      %v234 = vadd.f32 %v213, %v221
      %v235 = vadd.f32 %v214, %v221
      %v236 = vadd.f32 %v215, %v221
      %v237 = vadd.f32 %v216, %v221
      %238 = vxpose.xlu0.b32.start [1/16] %v222, 128
      %239 = vxpose.xlu0.b32.cont [2/16] %v223, 128
      %240 = vxpose.xlu0.b32.cont [3/16] %v224, 128
      %241 = vxpose.xlu0.b32.cont [4/16] %v225, 128
      %242 = vxpose.xlu0.b32.cont [5/16] %v226, 128
      %243 = vxpose.xlu0.b32.cont [6/16] %v227, 128
      %244 = vxpose.xlu0.b32.cont [7/16] %v228, 128
      %245 = vxpose.xlu0.b32.cont [8/16] %v229, 128
      %246 = vxpose.xlu0.b32.cont [9/16] %v230, 128
      %247 = vxpose.xlu0.b32.cont [10/16] %v231, 128
      %248 = vxpose.xlu0.b32.cont [11/16] %v232, 128
      %249 = vxpose.xlu0.b32.cont [12/16] %v233, 128
      %250 = vxpose.xlu0.b32.cont [13/16] %v234, 128
      %251 = vxpose.xlu0.b32.cont [14/16] %v235, 128
      %252 = vxpose.xlu0.b32.cont [15/16] %v236, 128
      %253 = vxpose.xlu0.b32.end [16/16] %v237, 128
      %v254 = vpop.trf.xlu0
      %v255 = vpop.trf.xlu0
      %v256 = vpop.trf.xlu0
      %v257 = vpop.trf.xlu0
      %v258 = vpop.trf.xlu0
      %v259 = vpop.trf.xlu0
      %v260 = vpop.trf.xlu0
      %v261 = vpop.trf.xlu0
      %v262 = vpop.trf.xlu0
      %v263 = vpop.trf.xlu0
      %v264 = vpop.trf.xlu0
      %v265 = vpop.trf.xlu0
      %v266 = vpop.trf.xlu0
      %v267 = vpop.trf.xlu0
      %v268 = vpop.trf.xlu0
      %v269 = vpop.trf.xlu0
      %270 = vst [vmem:[%s179] sm:$0xff] %v254
      %p271 = scmp.lt.s32.totalorder %s17, 1
      %s272 = scalar_select %p271, %s17, 1
      %p273 = scmp.lt.s32.totalorder %s18, 1
      %s274 = scalar_select %p273, %s18, 1
      %s275 = smul.addr %s272, 2
      %s276 = sadd.s32 %s274, %s275
      %s277 = smul.addr %s276, 8
      %s278 = scalar_lea.vmem %s2, %s277
      // Predicated region
      $region29: #{basic_conv2d.3} parent=27 // pred_check
        %p279 = pneg %p94
      $region30: #{basic_conv2d.3} parent=27 // pred_check_branch
        %281 = sbr.rel (%p279) target = $region32
      $region31: #{basic_conv2d.3} parent=27 // pred_region
        _
      $region32: #{basic_conv2d.3} parent=27 // pred_fallthru
        _
    $region28: #{basic_conv2d.3} parent=5 // pred_fallthru
      _
    %p282 = scmp.le.s32.totalorder 2, %s8
    // Predicated region
    $region33: #{basic_conv2d.3} parent=5 // pred_check
      %p283 = pneg %p282
    $region34: #{basic_conv2d.3} parent=5 // pred_check_branch
      %285 = sbr.rel (%p283) target = $region36
    $region35: #{basic_conv2d.3} parent=5 // pred_region
      %s286 = ssub.s32 %s8, 2
      // Predicated region
      $region37: #{basic_conv2d.3} parent=35 // pred_check
        %p287 = pneg %p100
      $region38: #{basic_conv2d.3} parent=35 // pred_check_branch
        %289 = sbr.rel (%p287) target = $region40
      $region39: #{basic_conv2d.3} parent=35 // pred_region
        %p290 = scmp.lt.s32.totalorder %s19, 1
        %s291 = scalar_select %p290, %s19, 1
        %p292 = scmp.lt.s32.totalorder %s20, 1
        %s293 = scalar_select %p292, %s20, 1
        %s294 = smul.addr %s291, 2
        %s295 = sadd.s32 %s293, %s294
        %s296 = smul.addr %s295, 8
        %s297 = scalar_lea.vmem %s2, %s296
      $region40: #{basic_conv2d.3} parent=35 // pred_fallthru
        _
    $region36: #{basic_conv2d.3} parent=5 // pred_fallthru
      _
  $region6: #{basic_conv2d.3} parent=0 // loop_footer
    %s12 = sadd.s32 1, %s8
  $region7: #{basic_conv2d.3} parent=0 // loop_footer_branch
    %7 = sbr.rel target = $region3
  $region8: #{basic_conv2d.3} parent=0 // loop_exit
    _

// kernel: basic_conv2d.2
$region0: #{basic_conv2d.2}
  #allocation0 [shape = 'u32[]', space=smem, size = 0x4, offset = 0x4, fixed_abs, tag = 'smem constant byte address 0x4 - core index']
  #allocation1 [shape = 'u32[144,128]{1,0:T(1,128)}', space=vmem, size = 0x12000, scoped, tag = 'internal scratch']
  %s0 = inlined_call_operand.vmem [shape: f32[2,18,18,4], index: 0, kind: input, shape index: {}]
  %s1 = inlined_call_operand.vmem [shape: f32[128,128], index: 1, kind: input, shape index: {}]
  %s2 = inlined_call_operand.vmem [shape: f32[2,256,128], index: 2, kind: output, shape index: {0}]
  %s3 = inlined_call_operand.vmem [shape: f32[2,2,8,128], index: 3, kind: output, shape index: {1}]
  %4 = xla_tuple %s2, %s3
  %s5 = sld [smem:[#allocation0]]
  $region49: #{basic_conv2d.2} parent=0
    _
  %s7 = ssub.s32 1, %s5
  %s8 = scalar_select 0, %s7, %s5
  loop: start=0, step=1, limit=6
  $region2: #{basic_conv2d.2} parent=0 // loop_pre_header
    _
  $region3: #{basic_conv2d.2} parent=0 // loop_header
    %s10 = sphi 0, %s14
    %p11 = scmp.ge.s32.totalorder %s10, 6
    %s17 = sphi 0, %s29
    %s18 = sphi 0, %s25
    %s19 = sphi 0, %s17
    %s20 = sphi 0, %s18
    %s21 = sphi 0, %s19
    %s22 = sphi 0, %s20
    %s32 = sphi 0, %s34
    %s35 = sphi 0, %s32
    %s36 = sphi 0, %s35
    %s52 = sphi 0, %s36
    %s56 = sphi 0, %s56
    %s58 = sphi 0, %s56
    %s59 = sphi 0, %s58
    %s73 = sphi 0, %s59
    %s81 = sphi 0, %s83
    %s84 = sphi 0, %s81
    %s85 = sphi 0, %s84
    %s101 = sphi 0, %s85
    %s109 = sphi 0, %s111
    %s112 = sphi 0, %s109
    %s113 = sphi 0, %s112
    %s129 = sphi 0, %s113
  $region4: #{basic_conv2d.2} parent=0 // loop_header_branch
    %13 = sbr.rel (%p11) target = $region8
  $region5: #{basic_conv2d.2} parent=0 // loop_body
    %s15 = ssub.s32 %s10, 1
    %s16 = ssub.s32 %s10, 2
    %s23 = sadd.s32 1, %s18
    %p24 = scmp.ge.s32.totalorder %s23, 2
    %s25 = scalar_select %p24, 0, %s23
    %s26 = sadd.s32 1, %s17
    %s27 = scalar_select %p24, %s26, %s17
    %p28 = scmp.ge.s32.totalorder %s27, 2
    %s29 = scalar_select %p28, 0, %s27
    %s30 = ssub.s32 %s17, %s29
    %p31 = scmp.eq.s32.totalorder %s30, 0
    %s33 = sadd.s32 %s32, 1
    %s34 = scalar_select %p31, %s32, %s33
    %p37 = pneg %p31
    %p38 = scmp.eq.s32.totalorder %s10, 3
    %p39 = por %p37, %p38
    %p40 = scmp.ne.s32.totalorder %s32, %s35
    %p41 = scmp.eq.s32.totalorder %s10, 0
    %p42 = por %p40, %p41
    %p43 = scmp.ne.s32.totalorder %s32, %s35
    %p44 = scmp.eq.s32.totalorder %s15, 3
    %p45 = por %p43, %p44
    %p46 = scmp.ne.s32.totalorder %s35, %s36
    %p47 = scmp.eq.s32.totalorder %s15, 0
    %p48 = por %p46, %p47
    %p49 = scmp.ne.s32.totalorder %s35, %s36
    %p50 = scmp.eq.s32.totalorder %s16, 3
    %p51 = por %p49, %p50
    %p53 = scmp.ne.s32.totalorder %s36, %s52
    %p54 = scmp.eq.s32.totalorder %s16, 0
    %p55 = por %p53, %p54
    %s57 = sadd.s32 %s56, 1
    %p60 = scmp.eq.s32.totalorder %s10, 3
    %p61 = scmp.ne.s32.totalorder %s56, %s58
    %p62 = scmp.eq.s32.totalorder %s10, 0
    %p63 = por %p61, %p62
    %p64 = scmp.ne.s32.totalorder %s56, %s58
    %p65 = scmp.eq.s32.totalorder %s15, 3
    %p66 = por %p64, %p65
    %p67 = scmp.ne.s32.totalorder %s58, %s59
    %p68 = scmp.eq.s32.totalorder %s15, 0
    %p69 = por %p67, %p68
    %p70 = scmp.ne.s32.totalorder %s58, %s59
    %p71 = scmp.eq.s32.totalorder %s16, 3
    %p72 = por %p70, %p71
    %p74 = scmp.ne.s32.totalorder %s59, %s73
    %p75 = scmp.eq.s32.totalorder %s16, 0
    %p76 = por %p74, %p75
    %s77 = ssub.s32 %s17, %s29
    %s78 = ssub.s32 %s18, %s25
    %s79 = sor.u32 %s77, %s78
    %p80 = scmp.eq.s32.totalorder %s79, 0
    %s82 = sadd.s32 %s81, 1
    %s83 = scalar_select %p80, %s81, %s82
    %p86 = pneg %p80
    %p87 = scmp.eq.s32.totalorder %s10, 3
    %p88 = por %p86, %p87
    %p89 = scmp.ne.s32.totalorder %s81, %s84
    %p90 = scmp.eq.s32.totalorder %s10, 0
    %p91 = por %p89, %p90
    %p92 = scmp.ne.s32.totalorder %s81, %s84
    %p93 = scmp.eq.s32.totalorder %s15, 3
    %p94 = por %p92, %p93
    %p95 = scmp.ne.s32.totalorder %s84, %s85
    %p96 = scmp.eq.s32.totalorder %s15, 0
    %p97 = por %p95, %p96
    %p98 = scmp.ne.s32.totalorder %s84, %s85
    %p99 = scmp.eq.s32.totalorder %s16, 3
    %p100 = por %p98, %p99
    %p102 = scmp.ne.s32.totalorder %s85, %s101
    %p103 = scmp.eq.s32.totalorder %s16, 0
    %p104 = por %p102, %p103
    %s105 = ssub.s32 %s17, %s29
    %s106 = ssub.s32 %s18, %s25
    %s107 = sor.u32 %s105, %s106
    %p108 = scmp.eq.s32.totalorder %s107, 0
    %s110 = sadd.s32 %s109, 1
    %s111 = scalar_select %p108, %s109, %s110
    %p114 = pneg %p108
    %p115 = scmp.eq.s32.totalorder %s10, 3
    %p116 = por %p114, %p115
    %p117 = scmp.ne.s32.totalorder %s109, %s112
    %p118 = scmp.eq.s32.totalorder %s10, 0
    %p119 = por %p117, %p118
    %p120 = scmp.ne.s32.totalorder %s109, %s112
    %p121 = scmp.eq.s32.totalorder %s15, 3
    %p122 = por %p120, %p121
    %p123 = scmp.ne.s32.totalorder %s112, %s113
    %p124 = scmp.eq.s32.totalorder %s15, 0
    %p125 = por %p123, %p124
    %p126 = scmp.ne.s32.totalorder %s112, %s113
    %p127 = scmp.eq.s32.totalorder %s16, 3
    %p128 = por %p126, %p127
    %p130 = scmp.ne.s32.totalorder %s113, %s129
    %p131 = scmp.eq.s32.totalorder %s16, 0
    %p132 = por %p130, %p131
    %p133 = scmp.le.s32.totalorder 1, %s10
    %p134 = scmp.lt.s32.totalorder %s10, 5
    %p135 = pnand %p133, %p134
    %p136 = pneg %p135
    // Predicated region
    $region9: #{basic_conv2d.2} parent=5 // pred_check
      _
    $region10: #{basic_conv2d.2} parent=5 // pred_check_branch
      %138 = sbr.rel (%p135) target = $region12
    $region11: #{basic_conv2d.2} parent=5 // pred_region
      %s139 = ssub.s32 %s10, 1
      // Predicated region
      $region13: #{basic_conv2d.2} parent=11 // pred_check
        %p140 = pneg %p69
      $region14: #{basic_conv2d.2} parent=11 // pred_check_branch
        %142 = sbr.rel (%p140) target = $region16
      $region15: #{basic_conv2d.2} parent=11 // pred_region
        _
      $region16: #{basic_conv2d.2} parent=11 // pred_fallthru
        _
    $region12: #{basic_conv2d.2} parent=5 // pred_fallthru
      _
    %p143 = scmp.lt.s32.totalorder %s10, 4
    // Predicated region
    $region17: #{basic_conv2d.2} parent=5 // pred_check
      %p144 = pneg %p143
    $region18: #{basic_conv2d.2} parent=5 // pred_check_branch
      %146 = sbr.rel (%p144) target = $region20
    $region19: #{basic_conv2d.2} parent=5 // pred_region
      // Predicated region
      $region21: #{basic_conv2d.2} parent=19 // pred_check
        %p147 = pneg %p42
      $region22: #{basic_conv2d.2} parent=19 // pred_check_branch
        %149 = sbr.rel (%p147) target = $region24
      $region23: #{basic_conv2d.2} parent=19 // pred_region
        %p150 = scmp.lt.s32.totalorder %s17, 1
        %s151 = scalar_select %p150, %s17, 1
        %s152 = smul.addr %s151, 54
        %s153 = smul.addr %s152, 8
        %s154 = scalar_lea.vmem %s0, %s153
      $region24: #{basic_conv2d.2} parent=19 // pred_fallthru
        _
    $region20: #{basic_conv2d.2} parent=5 // pred_fallthru
      _
    %p155 = scmp.le.s32.totalorder 1, %s10
    %p156 = scmp.lt.s32.totalorder %s10, 5
    %p157 = pnand %p155, %p156
    %p158 = pneg %p157
    // Predicated region
    $region25: #{basic_conv2d.2} parent=5 // pred_check
      _
    $region26: #{basic_conv2d.2} parent=5 // pred_check_branch
      %160 = sbr.rel (%p157) target = $region28
    $region27: #{basic_conv2d.2} parent=5 // pred_region
      %s161 = ssub.s32 %s10, 1
      %p162 = scmp.lt.s32.totalorder %s19, 1
      %s163 = scalar_select %p162, %s19, 1
      %s164 = smul.addr %s163, 54
      %s165 = smul.addr %s164, 8
      %s166 = scalar_lea.vmem %s0, %s165
      %p167 = pneg %p48
      %p168 = pneg %p45
      %p169 = pneg %p69
      %p170 = pneg %p66
      %p171 = pneg %p97
      %p172 = pneg %p94
      %s173 = smul.u32 16, %s20
      %p174 = scmp.lt.s32.totalorder %s19, 1
      %s175 = scalar_select %p174, %s19, 1
      %p176 = scmp.lt.s32.totalorder %s173, 31
      %s177 = scalar_select %p176, %s173, 31
      %s178 = smul.addr %s175, 32
      %s179 = sadd.s32 %s177, %s178
      %s180 = smul.addr %s179, 8
      %s181 = scalar_lea.vmem %s2, %s180
      %p182 = pneg %p125
      %p183 = pneg %p122
      %p184 = scmp.lt.s32.totalorder %s19, 1
      %s185 = scalar_select %p184, %s19, 1
      %p186 = scmp.lt.s32.totalorder %s20, 1
      %s187 = scalar_select %p186, %s20, 1
      %s188 = smul.addr %s185, 2
      %s189 = sadd.s32 %s187, %s188
      %s190 = smul.addr %s189, 8
      %s191 = scalar_lea.vmem %s3, %s190
      %p192 = scmp.lt.s32.totalorder %s19, 1
      %s193 = scalar_select %p192, %s19, 1
      %s194 = smul.addr %s193, 54
      %s195 = smul.addr %s194, 8
      %s196 = scalar_lea.vmem %s0, %s195
      %s197 = smul.u32 16, %s20
      %p198 = scmp.lt.s32.totalorder %s19, 1
      %s199 = scalar_select %p198, %s19, 1
      %p200 = scmp.lt.s32.totalorder %s197, 31
      %s201 = scalar_select %p200, %s197, 31
      %s202 = smul.addr %s199, 32
      %s203 = sadd.s32 %s201, %s202
      %s204 = smul.addr %s203, 8
      %s205 = scalar_lea.vmem %s2, %s204
      %s206 = smul.u32 16, %s20
      %p207 = scmp.lt.s32.totalorder %s19, 1
      %s208 = scalar_select %p207, %s19, 1
      %p209 = scmp.lt.s32.totalorder %s20, 1
      %s210 = scalar_select %p209, %s20, 1
      %s211 = smul.addr %s208, 2
      %s212 = sadd.s32 %s210, %s211
      %s213 = smul.addr %s212, 8
      %s214 = scalar_lea.vmem %s3, %s213
      %s215 = smul.u32 %s20, 8
      %s216 = smul.u32 %s215, 24
      %s217 = scalar_lea.vmem %s196, %s216
      %v218 = vld [vmem:[%s217] sm:$0xff]
      %v219 = vld [vmem:[%s217 + $0x8] sm:$0xff]
      %v220 = vld [vmem:[%s217 + $0x18] sm:$0xff]
      %v221 = vld [vmem:[%s217 + $0x20] sm:$0xff]
      %v222 = vld [vmem:[%s217 + $0x30] sm:$0xff]
      %v223 = vld [vmem:[%s217 + $0x38] sm:$0xff]
      %v224 = vld [vmem:[%s217 + $0x48] sm:$0xff]
      %v225 = vld [vmem:[%s217 + $0x50] sm:$0xff]
      %v226 = vld [vmem:[%s217 + $0x60] sm:$0xff]
      %v227 = vld [vmem:[%s217 + $0x68] sm:$0xff]
      %v228 = vld [vmem:[%s217 + $0x78] sm:$0xff]
      %v229 = vld [vmem:[%s217 + $0x80] sm:$0xff]
      %v230 = vld [vmem:[%s217 + $0x90] sm:$0xff]
      %v231 = vld [vmem:[%s217 + $0x98] sm:$0xff]
      %v232 = vld [vmem:[%s217 + $0xa8] sm:$0xff]
      %v233 = vld [vmem:[%s217 + $0xb0] sm:$0xff]
      %v234 = vld [vmem:[%s217 + $0x1] sm:$0xff]
      %v235 = vld [vmem:[%s217 + $0x9] sm:$0xff]
      %v236 = vld [vmem:[%s217 + $0x19] sm:$0xff]
      %v237 = vld [vmem:[%s217 + $0x21] sm:$0xff]
      %v238 = vld [vmem:[%s217 + $0x31] sm:$0xff]
      %v239 = vld [vmem:[%s217 + $0x39] sm:$0xff]
      %v240 = vld [vmem:[%s217 + $0x49] sm:$0xff]
      %v241 = vld [vmem:[%s217 + $0x51] sm:$0xff]
      %v242 = vld [vmem:[%s217 + $0x61] sm:$0xff]
      %v243 = vld [vmem:[%s217 + $0x69] sm:$0xff]
      %v244 = vld [vmem:[%s217 + $0x79] sm:$0xff]
      %v245 = vld [vmem:[%s217 + $0x81] sm:$0xff]
      %v246 = vld [vmem:[%s217 + $0x91] sm:$0xff]
      %v247 = vld [vmem:[%s217 + $0x99] sm:$0xff]
      %v248 = vld [vmem:[%s217 + $0xa9] sm:$0xff]
      %v249 = vld [vmem:[%s217 + $0xb1] sm:$0xff]
      %v250 = vld [vmem:[%s217 + $0x2] sm:$0xff]
      %v251 = vld [vmem:[%s217 + $0xa] sm:$0xff]
      %v252 = vld [vmem:[%s217 + $0x1a] sm:$0xff]
      %v253 = vld [vmem:[%s217 + $0x22] sm:$0xff]
      %v254 = vld [vmem:[%s217 + $0x32] sm:$0xff]
      %v255 = vld [vmem:[%s217 + $0x3a] sm:$0xff]
      %v256 = vld [vmem:[%s217 + $0x4a] sm:$0xff]
      %v257 = vld [vmem:[%s217 + $0x52] sm:$0xff]
      %v258 = vld [vmem:[%s217 + $0x62] sm:$0xff]
      %v259 = vld [vmem:[%s217 + $0x6a] sm:$0xff]
      %v260 = vld [vmem:[%s217 + $0x7a] sm:$0xff]
      %v261 = vld [vmem:[%s217 + $0x82] sm:$0xff]
      %v262 = vld [vmem:[%s217 + $0x92] sm:$0xff]
      %v263 = vld [vmem:[%s217 + $0x9a] sm:$0xff]
      %v264 = vld [vmem:[%s217 + $0xaa] sm:$0xff]
      %v265 = vld [vmem:[%s217 + $0xb2] sm:$0xff]
      %s266 = sadd.s32 %s215, 1
      %s267 = smul.u32 %s266, 24
      %s268 = scalar_lea.vmem %s196, %s267
      %v269 = vld [vmem:[%s268] sm:$0xff]
      %v270 = vld [vmem:[%s268 + $0x8] sm:$0xff]
      %v271 = vld [vmem:[%s268 + $0x18] sm:$0xff]
      %v272 = vld [vmem:[%s268 + $0x20] sm:$0xff]
      %v273 = vld [vmem:[%s268 + $0x30] sm:$0xff]
      %v274 = vld [vmem:[%s268 + $0x38] sm:$0xff]
      %v275 = vld [vmem:[%s268 + $0x48] sm:$0xff]
      %v276 = vld [vmem:[%s268 + $0x50] sm:$0xff]
      %v277 = vld [vmem:[%s268 + $0x60] sm:$0xff]
      %v278 = vld [vmem:[%s268 + $0x68] sm:$0xff]
      %v279 = vld [vmem:[%s268 + $0x78] sm:$0xff]
      %v280 = vld [vmem:[%s268 + $0x80] sm:$0xff]
      %v281 = vld [vmem:[%s268 + $0x90] sm:$0xff]
      %v282 = vld [vmem:[%s268 + $0x98] sm:$0xff]
      %v283 = vld [vmem:[%s268 + $0xa8] sm:$0xff]
      %v284 = vld [vmem:[%s268 + $0xb0] sm:$0xff]
      %v285 = vld [vmem:[%s268 + $0x1] sm:$0xff]
      %v286 = vld [vmem:[%s268 + $0x9] sm:$0xff]
      %v287 = vld [vmem:[%s268 + $0x19] sm:$0xff]
      %v288 = vld [vmem:[%s268 + $0x21] sm:$0xff]
      %v289 = vld [vmem:[%s268 + $0x31] sm:$0xff]
      %v290 = vld [vmem:[%s268 + $0x39] sm:$0xff]
      %v291 = vld [vmem:[%s268 + $0x49] sm:$0xff]
      %v292 = vld [vmem:[%s268 + $0x51] sm:$0xff]
      %v293 = vld [vmem:[%s268 + $0x61] sm:$0xff]
      %v294 = vld [vmem:[%s268 + $0x69] sm:$0xff]
      %v295 = vld [vmem:[%s268 + $0x79] sm:$0xff]
      %v296 = vld [vmem:[%s268 + $0x81] sm:$0xff]
      %v297 = vld [vmem:[%s268 + $0x91] sm:$0xff]
      %v298 = vld [vmem:[%s268 + $0x99] sm:$0xff]
      %v299 = vld [vmem:[%s268 + $0xa9] sm:$0xff]
      %v300 = vld [vmem:[%s268 + $0xb1] sm:$0xff]
      %v301 = vld [vmem:[%s268 + $0x2] sm:$0xff]
      %v302 = vld [vmem:[%s268 + $0xa] sm:$0xff]
      %v303 = vld [vmem:[%s268 + $0x1a] sm:$0xff]
      %v304 = vld [vmem:[%s268 + $0x22] sm:$0xff]
      %v305 = vld [vmem:[%s268 + $0x32] sm:$0xff]
      %v306 = vld [vmem:[%s268 + $0x3a] sm:$0xff]
      %v307 = vld [vmem:[%s268 + $0x4a] sm:$0xff]
      %v308 = vld [vmem:[%s268 + $0x52] sm:$0xff]
      %v309 = vld [vmem:[%s268 + $0x62] sm:$0xff]
      %v310 = vld [vmem:[%s268 + $0x6a] sm:$0xff]
      %v311 = vld [vmem:[%s268 + $0x7a] sm:$0xff]
      %v312 = vld [vmem:[%s268 + $0x82] sm:$0xff]
      %v313 = vld [vmem:[%s268 + $0x92] sm:$0xff]
      %v314 = vld [vmem:[%s268 + $0x9a] sm:$0xff]
      %v315 = vld [vmem:[%s268 + $0xaa] sm:$0xff]
      %v316 = vld [vmem:[%s268 + $0xb2] sm:$0xff]
      %s317 = sadd.s32 %s215, 2
      %s318 = smul.u32 %s317, 24
      %s319 = scalar_lea.vmem %s196, %s318
      %v320 = vld [vmem:[%s319] sm:$0xff]
      %v321 = vld [vmem:[%s319 + $0x8] sm:$0xff]
      %v322 = vld [vmem:[%s319 + $0x18] sm:$0xff]
      %v323 = vld [vmem:[%s319 + $0x20] sm:$0xff]
      %v324 = vld [vmem:[%s319 + $0x30] sm:$0xff]
      %v325 = vld [vmem:[%s319 + $0x38] sm:$0xff]
      %v326 = vld [vmem:[%s319 + $0x48] sm:$0xff]
      %v327 = vld [vmem:[%s319 + $0x50] sm:$0xff]
      %v328 = vld [vmem:[%s319 + $0x60] sm:$0xff]
      %v329 = vld [vmem:[%s319 + $0x68] sm:$0xff]
      %v330 = vld [vmem:[%s319 + $0x78] sm:$0xff]
      %v331 = vld [vmem:[%s319 + $0x80] sm:$0xff]
      %v332 = vld [vmem:[%s319 + $0x90] sm:$0xff]
      %v333 = vld [vmem:[%s319 + $0x98] sm:$0xff]
      %v334 = vld [vmem:[%s319 + $0xa8] sm:$0xff]
      %v335 = vld [vmem:[%s319 + $0xb0] sm:$0xff]
      %v336 = vld [vmem:[%s319 + $0x1] sm:$0xff]
      %v337 = vld [vmem:[%s319 + $0x9] sm:$0xff]
      %v338 = vld [vmem:[%s319 + $0x19] sm:$0xff]
      %v339 = vld [vmem:[%s319 + $0x21] sm:$0xff]
      %v340 = vld [vmem:[%s319 + $0x31] sm:$0xff]
      %v341 = vld [vmem:[%s319 + $0x39] sm:$0xff]
      %v342 = vld [vmem:[%s319 + $0x49] sm:$0xff]
      %v343 = vld [vmem:[%s319 + $0x51] sm:$0xff]
      %v344 = vld [vmem:[%s319 + $0x61] sm:$0xff]
      %v345 = vld [vmem:[%s319 + $0x69] sm:$0xff]
      %v346 = vld [vmem:[%s319 + $0x79] sm:$0xff]
      %v347 = vld [vmem:[%s319 + $0x81] sm:$0xff]
      %v348 = vld [vmem:[%s319 + $0x91] sm:$0xff]
      %v349 = vld [vmem:[%s319 + $0x99] sm:$0xff]
      %v350 = vld [vmem:[%s319 + $0xa9] sm:$0xff]
      %v351 = vld [vmem:[%s319 + $0xb1] sm:$0xff]
      %v352 = vld [vmem:[%s319 + $0x2] sm:$0xff]
      %v353 = vld [vmem:[%s319 + $0xa] sm:$0xff]
      %v354 = vld [vmem:[%s319 + $0x1a] sm:$0xff]
      %v355 = vld [vmem:[%s319 + $0x22] sm:$0xff]
      %v356 = vld [vmem:[%s319 + $0x32] sm:$0xff]
      %v357 = vld [vmem:[%s319 + $0x3a] sm:$0xff]
      %v358 = vld [vmem:[%s319 + $0x4a] sm:$0xff]
      %v359 = vld [vmem:[%s319 + $0x52] sm:$0xff]
      %v360 = vld [vmem:[%s319 + $0x62] sm:$0xff]
      %v361 = vld [vmem:[%s319 + $0x6a] sm:$0xff]
      %v362 = vld [vmem:[%s319 + $0x7a] sm:$0xff]
      %v363 = vld [vmem:[%s319 + $0x82] sm:$0xff]
      %v364 = vld [vmem:[%s319 + $0x92] sm:$0xff]
      %v365 = vld [vmem:[%s319 + $0x9a] sm:$0xff]
      %v366 = vld [vmem:[%s319 + $0xaa] sm:$0xff]
      %v367 = vld [vmem:[%s319 + $0xb2] sm:$0xff]
      %384 = vrot.lane.b32.xlu0 %v234, 4
      %v385 = vpop.permute.xlu0 %384
      %386 = vrot.lane.b32.xlu0 %v235, 4
      %v387 = vpop.permute.xlu0 %386
      %388 = vrot.lane.b32.xlu0 %v236, 4
      %v389 = vpop.permute.xlu0 %388
      %390 = vrot.lane.b32.xlu0 %v237, 4
      %v391 = vpop.permute.xlu0 %390
      %392 = vrot.lane.b32.xlu0 %v238, 4
      %v393 = vpop.permute.xlu0 %392
      %394 = vrot.lane.b32.xlu0 %v239, 4
      %v395 = vpop.permute.xlu0 %394
      %396 = vrot.lane.b32.xlu0 %v240, 4
      %v397 = vpop.permute.xlu0 %396
      %398 = vrot.lane.b32.xlu0 %v241, 4
      %v399 = vpop.permute.xlu0 %398
      %400 = vrot.lane.b32.xlu0 %v242, 4
      %v401 = vpop.permute.xlu0 %400
      %402 = vrot.lane.b32.xlu0 %v243, 4
      %v403 = vpop.permute.xlu0 %402
      %404 = vrot.lane.b32.xlu0 %v244, 4
      %v405 = vpop.permute.xlu0 %404
      %406 = vrot.lane.b32.xlu0 %v245, 4
      %v407 = vpop.permute.xlu0 %406
      %408 = vrot.lane.b32.xlu0 %v246, 4
      %v409 = vpop.permute.xlu0 %408
      %410 = vrot.lane.b32.xlu0 %v247, 4
      %v411 = vpop.permute.xlu0 %410
      %412 = vrot.lane.b32.xlu0 %v248, 4
      %v413 = vpop.permute.xlu0 %412
      %414 = vrot.lane.b32.xlu0 %v249, 4
      %v415 = vpop.permute.xlu0 %414
      %448 = vrot.lane.b32.xlu0 %v250, 8
      %v449 = vpop.permute.xlu0 %448
      %450 = vrot.lane.b32.xlu0 %v251, 8
      %v451 = vpop.permute.xlu0 %450
      %452 = vrot.lane.b32.xlu0 %v252, 8
      %v453 = vpop.permute.xlu0 %452
      %454 = vrot.lane.b32.xlu0 %v253, 8
      %v455 = vpop.permute.xlu0 %454
      %456 = vrot.lane.b32.xlu0 %v254, 8
      %v457 = vpop.permute.xlu0 %456
      %458 = vrot.lane.b32.xlu0 %v255, 8
      %v459 = vpop.permute.xlu0 %458
      %460 = vrot.lane.b32.xlu0 %v256, 8
      %v461 = vpop.permute.xlu0 %460
      %462 = vrot.lane.b32.xlu0 %v257, 8
      %v463 = vpop.permute.xlu0 %462
      %464 = vrot.lane.b32.xlu0 %v258, 8
      %v465 = vpop.permute.xlu0 %464
      %466 = vrot.lane.b32.xlu0 %v259, 8
      %v467 = vpop.permute.xlu0 %466
      %468 = vrot.lane.b32.xlu0 %v260, 8
      %v469 = vpop.permute.xlu0 %468
      %470 = vrot.lane.b32.xlu0 %v261, 8
      %v471 = vpop.permute.xlu0 %470
      %472 = vrot.lane.b32.xlu0 %v262, 8
      %v473 = vpop.permute.xlu0 %472
      %474 = vrot.lane.b32.xlu0 %v263, 8
      %v475 = vpop.permute.xlu0 %474
      %476 = vrot.lane.b32.xlu0 %v264, 8
      %v477 = vpop.permute.xlu0 %476
      %478 = vrot.lane.b32.xlu0 %v265, 8
      %v479 = vpop.permute.xlu0 %478
      %512 = vrot.lane.b32.xlu0 %v269, 12
      %v513 = vpop.permute.xlu0 %512
      %514 = vrot.lane.b32.xlu0 %v270, 12
      %v515 = vpop.permute.xlu0 %514
      %516 = vrot.lane.b32.xlu0 %v271, 12
      %v517 = vpop.permute.xlu0 %516
      %518 = vrot.lane.b32.xlu0 %v272, 12
      %v519 = vpop.permute.xlu0 %518
      %520 = vrot.lane.b32.xlu0 %v273, 12
      %v521 = vpop.permute.xlu0 %520
      %522 = vrot.lane.b32.xlu0 %v274, 12
      %v523 = vpop.permute.xlu0 %522
      %524 = vrot.lane.b32.xlu0 %v275, 12
      %v525 = vpop.permute.xlu0 %524
      %526 = vrot.lane.b32.xlu0 %v276, 12
      %v527 = vpop.permute.xlu0 %526
      %528 = vrot.lane.b32.xlu0 %v277, 12
      %v529 = vpop.permute.xlu0 %528
      %530 = vrot.lane.b32.xlu0 %v278, 12
      %v531 = vpop.permute.xlu0 %530
      %532 = vrot.lane.b32.xlu0 %v279, 12
      %v533 = vpop.permute.xlu0 %532
      %534 = vrot.lane.b32.xlu0 %v280, 12
      %v535 = vpop.permute.xlu0 %534
      %536 = vrot.lane.b32.xlu0 %v281, 12
      %v537 = vpop.permute.xlu0 %536
      %538 = vrot.lane.b32.xlu0 %v282, 12
      %v539 = vpop.permute.xlu0 %538
      %540 = vrot.lane.b32.xlu0 %v283, 12
      %v541 = vpop.permute.xlu0 %540
      %542 = vrot.lane.b32.xlu0 %v284, 12
      %v543 = vpop.permute.xlu0 %542
      %576 = vrot.lane.b32.xlu0 %v285, 16
      %v577 = vpop.permute.xlu0 %576
      %578 = vrot.lane.b32.xlu0 %v286, 16
      %v579 = vpop.permute.xlu0 %578
      %580 = vrot.lane.b32.xlu0 %v287, 16
      %v581 = vpop.permute.xlu0 %580
      %582 = vrot.lane.b32.xlu0 %v288, 16
      %v583 = vpop.permute.xlu0 %582
      %584 = vrot.lane.b32.xlu0 %v289, 16
      %v585 = vpop.permute.xlu0 %584
      %586 = vrot.lane.b32.xlu0 %v290, 16
      %v587 = vpop.permute.xlu0 %586
      %588 = vrot.lane.b32.xlu0 %v291, 16
      %v589 = vpop.permute.xlu0 %588
      %590 = vrot.lane.b32.xlu0 %v292, 16
      %v591 = vpop.permute.xlu0 %590
      %592 = vrot.lane.b32.xlu0 %v293, 16
      %v593 = vpop.permute.xlu0 %592
      %594 = vrot.lane.b32.xlu0 %v294, 16
      %v595 = vpop.permute.xlu0 %594
      %596 = vrot.lane.b32.xlu0 %v295, 16
      %v597 = vpop.permute.xlu0 %596
      %598 = vrot.lane.b32.xlu0 %v296, 16
      %v599 = vpop.permute.xlu0 %598
      %600 = vrot.lane.b32.xlu0 %v297, 16
      %v601 = vpop.permute.xlu0 %600
      %602 = vrot.lane.b32.xlu0 %v298, 16
      %v603 = vpop.permute.xlu0 %602
      %604 = vrot.lane.b32.xlu0 %v299, 16
      %v605 = vpop.permute.xlu0 %604
      %606 = vrot.lane.b32.xlu0 %v300, 16
      %v607 = vpop.permute.xlu0 %606
      %640 = vrot.lane.b32.xlu0 %v301, 20
      %v641 = vpop.permute.xlu0 %640
      %642 = vrot.lane.b32.xlu0 %v302, 20
      %v643 = vpop.permute.xlu0 %642
      %644 = vrot.lane.b32.xlu0 %v303, 20
      %v645 = vpop.permute.xlu0 %644
      %646 = vrot.lane.b32.xlu0 %v304, 20
      %v647 = vpop.permute.xlu0 %646
      %648 = vrot.lane.b32.xlu0 %v305, 20
      %v649 = vpop.permute.xlu0 %648
      %650 = vrot.lane.b32.xlu0 %v306, 20
      %v651 = vpop.permute.xlu0 %650
      %652 = vrot.lane.b32.xlu0 %v307, 20
      %v653 = vpop.permute.xlu0 %652
      %654 = vrot.lane.b32.xlu0 %v308, 20
      %v655 = vpop.permute.xlu0 %654
      %656 = vrot.lane.b32.xlu0 %v309, 20
      %v657 = vpop.permute.xlu0 %656
      %658 = vrot.lane.b32.xlu0 %v310, 20
      %v659 = vpop.permute.xlu0 %658
      %660 = vrot.lane.b32.xlu0 %v311, 20
      %v661 = vpop.permute.xlu0 %660
      %662 = vrot.lane.b32.xlu0 %v312, 20
      %v663 = vpop.permute.xlu0 %662
      %664 = vrot.lane.b32.xlu0 %v313, 20
      %v665 = vpop.permute.xlu0 %664
      %666 = vrot.lane.b32.xlu0 %v314, 20
      %v667 = vpop.permute.xlu0 %666
      %668 = vrot.lane.b32.xlu0 %v315, 20
      %v669 = vpop.permute.xlu0 %668
      %670 = vrot.lane.b32.xlu0 %v316, 20
      %v671 = vpop.permute.xlu0 %670
      %704 = vrot.lane.b32.xlu0 %v320, 24
      %v705 = vpop.permute.xlu0 %704
      %706 = vrot.lane.b32.xlu0 %v321, 24
      %v707 = vpop.permute.xlu0 %706
      %708 = vrot.lane.b32.xlu0 %v322, 24
      %v709 = vpop.permute.xlu0 %708
      %710 = vrot.lane.b32.xlu0 %v323, 24
      %v711 = vpop.permute.xlu0 %710
      %712 = vrot.lane.b32.xlu0 %v324, 24
      %v713 = vpop.permute.xlu0 %712
      %714 = vrot.lane.b32.xlu0 %v325, 24
      %v715 = vpop.permute.xlu0 %714
      %716 = vrot.lane.b32.xlu0 %v326, 24
      %v717 = vpop.permute.xlu0 %716
      %718 = vrot.lane.b32.xlu0 %v327, 24
      %v719 = vpop.permute.xlu0 %718
      %720 = vrot.lane.b32.xlu0 %v328, 24
      %v721 = vpop.permute.xlu0 %720
      %722 = vrot.lane.b32.xlu0 %v329, 24
      %v723 = vpop.permute.xlu0 %722
      %724 = vrot.lane.b32.xlu0 %v330, 24
      %v725 = vpop.permute.xlu0 %724
      %726 = vrot.lane.b32.xlu0 %v331, 24
      %v727 = vpop.permute.xlu0 %726
      %728 = vrot.lane.b32.xlu0 %v332, 24
      %v729 = vpop.permute.xlu0 %728
      %730 = vrot.lane.b32.xlu0 %v333, 24
      %v731 = vpop.permute.xlu0 %730
      %732 = vrot.lane.b32.xlu0 %v334, 24
      %v733 = vpop.permute.xlu0 %732
      %734 = vrot.lane.b32.xlu0 %v335, 24
      %v735 = vpop.permute.xlu0 %734
      %768 = vrot.lane.b32.xlu0 %v336, 28
      %v769 = vpop.permute.xlu0 %768
      %770 = vrot.lane.b32.xlu0 %v337, 28
      %v771 = vpop.permute.xlu0 %770
      %772 = vrot.lane.b32.xlu0 %v338, 28
      %v773 = vpop.permute.xlu0 %772
      %774 = vrot.lane.b32.xlu0 %v339, 28
      %v775 = vpop.permute.xlu0 %774
      %776 = vrot.lane.b32.xlu0 %v340, 28
      %v777 = vpop.permute.xlu0 %776
      %778 = vrot.lane.b32.xlu0 %v341, 28
      %v779 = vpop.permute.xlu0 %778
      %780 = vrot.lane.b32.xlu0 %v342, 28
      %v781 = vpop.permute.xlu0 %780
      %782 = vrot.lane.b32.xlu0 %v343, 28
      %v783 = vpop.permute.xlu0 %782
      %784 = vrot.lane.b32.xlu0 %v344, 28
      %v785 = vpop.permute.xlu0 %784
      %786 = vrot.lane.b32.xlu0 %v345, 28
      %v787 = vpop.permute.xlu0 %786
      %788 = vrot.lane.b32.xlu0 %v346, 28
      %v789 = vpop.permute.xlu0 %788
      %790 = vrot.lane.b32.xlu0 %v347, 28
      %v791 = vpop.permute.xlu0 %790
      %792 = vrot.lane.b32.xlu0 %v348, 28
      %v793 = vpop.permute.xlu0 %792
      %794 = vrot.lane.b32.xlu0 %v349, 28
      %v795 = vpop.permute.xlu0 %794
      %796 = vrot.lane.b32.xlu0 %v350, 28
      %v797 = vpop.permute.xlu0 %796
      %798 = vrot.lane.b32.xlu0 %v351, 28
      %v799 = vpop.permute.xlu0 %798
      %832 = vrot.lane.b32.xlu0 %v352, 32
      %v833 = vpop.permute.xlu0 %832
      %834 = vrot.lane.b32.xlu0 %v353, 32
      %v835 = vpop.permute.xlu0 %834
      %836 = vrot.lane.b32.xlu0 %v354, 32
      %v837 = vpop.permute.xlu0 %836
      %838 = vrot.lane.b32.xlu0 %v355, 32
      %v839 = vpop.permute.xlu0 %838
      %840 = vrot.lane.b32.xlu0 %v356, 32
      %v841 = vpop.permute.xlu0 %840
      %842 = vrot.lane.b32.xlu0 %v357, 32
      %v843 = vpop.permute.xlu0 %842
      %844 = vrot.lane.b32.xlu0 %v358, 32
      %v845 = vpop.permute.xlu0 %844
      %846 = vrot.lane.b32.xlu0 %v359, 32
      %v847 = vpop.permute.xlu0 %846
      %848 = vrot.lane.b32.xlu0 %v360, 32
      %v849 = vpop.permute.xlu0 %848
      %850 = vrot.lane.b32.xlu0 %v361, 32
      %v851 = vpop.permute.xlu0 %850
      %852 = vrot.lane.b32.xlu0 %v362, 32
      %v853 = vpop.permute.xlu0 %852
      %854 = vrot.lane.b32.xlu0 %v363, 32
      %v855 = vpop.permute.xlu0 %854
      %856 = vrot.lane.b32.xlu0 %v364, 32
      %v857 = vpop.permute.xlu0 %856
      %858 = vrot.lane.b32.xlu0 %v365, 32
      %v859 = vpop.permute.xlu0 %858
      %860 = vrot.lane.b32.xlu0 %v366, 32
      %v861 = vpop.permute.xlu0 %860
      %862 = vrot.lane.b32.xlu0 %v367, 32
      %v863 = vpop.permute.xlu0 %862
      %vm880 = vcmask 31744
      %v881 = vsel %vm880, %v218, %v385
      %v882 = vsel %vm880, %v219, %v387
      %v883 = vsel %vm880, %v220, %v389
      %v884 = vsel %vm880, %v221, %v391
      %v885 = vsel %vm880, %v222, %v393
      %v886 = vsel %vm880, %v223, %v395
      %v887 = vsel %vm880, %v224, %v397
      %v888 = vsel %vm880, %v225, %v399
      %v889 = vsel %vm880, %v226, %v401
      %v890 = vsel %vm880, %v227, %v403
      %v891 = vsel %vm880, %v228, %v405
      %v892 = vsel %vm880, %v229, %v407
      %v893 = vsel %vm880, %v230, %v409
      %v894 = vsel %vm880, %v231, %v411
      %v895 = vsel %vm880, %v232, %v413
      %v896 = vsel %vm880, %v233, %v415
      %vm897 = vcmask 64512
      %v898 = vsel %vm897, %v881, %v449
      %v899 = vsel %vm897, %v882, %v451
      %v900 = vsel %vm897, %v883, %v453
      %v901 = vsel %vm897, %v884, %v455
      %v902 = vsel %vm897, %v885, %v457
      %v903 = vsel %vm897, %v886, %v459
      %v904 = vsel %vm897, %v887, %v461
      %v905 = vsel %vm897, %v888, %v463
      %v906 = vsel %vm897, %v889, %v465
      %v907 = vsel %vm897, %v890, %v467
      %v908 = vsel %vm897, %v891, %v469
      %v909 = vsel %vm897, %v892, %v471
      %v910 = vsel %vm897, %v893, %v473
      %v911 = vsel %vm897, %v894, %v475
      %v912 = vsel %vm897, %v895, %v477
      %v913 = vsel %vm897, %v896, %v479
      %vm914 = vcmask 97280
      %v915 = vsel %vm914, %v898, %v513
      %v916 = vsel %vm914, %v899, %v515
      %v917 = vsel %vm914, %v900, %v517
      %v918 = vsel %vm914, %v901, %v519
      %v919 = vsel %vm914, %v902, %v521
      %v920 = vsel %vm914, %v903, %v523
      %v921 = vsel %vm914, %v904, %v525
      %v922 = vsel %vm914, %v905, %v527
      %v923 = vsel %vm914, %v906, %v529
      %v924 = vsel %vm914, %v907, %v531
      %v925 = vsel %vm914, %v908, %v533
      %v926 = vsel %vm914, %v909, %v535
      %v927 = vsel %vm914, %v910, %v537
      %v928 = vsel %vm914, %v911, %v539
      %v929 = vsel %vm914, %v912, %v541
      %v930 = vsel %vm914, %v913, %v543
      %vm931 = vcmask 130048
      %v932 = vsel %vm931, %v915, %v577
      %v933 = vsel %vm931, %v916, %v579
      %v934 = vsel %vm931, %v917, %v581
      %v935 = vsel %vm931, %v918, %v583
      %v936 = vsel %vm931, %v919, %v585
      %v937 = vsel %vm931, %v920, %v587
      %v938 = vsel %vm931, %v921, %v589
      %v939 = vsel %vm931, %v922, %v591
      %v940 = vsel %vm931, %v923, %v593
      %v941 = vsel %vm931, %v924, %v595
      %v942 = vsel %vm931, %v925, %v597
      %v943 = vsel %vm931, %v926, %v599
      %v944 = vsel %vm931, %v927, %v601
      %v945 = vsel %vm931, %v928, %v603
      %v946 = vsel %vm931, %v929, %v605
      %v947 = vsel %vm931, %v930, %v607
      %vm948 = vcmask 162816
      %v949 = vsel %vm948, %v932, %v641
      %v950 = vsel %vm948, %v933, %v643
      %v951 = vsel %vm948, %v934, %v645
      %v952 = vsel %vm948, %v935, %v647
      %v953 = vsel %vm948, %v936, %v649
      %v954 = vsel %vm948, %v937, %v651
      %v955 = vsel %vm948, %v938, %v653
      %v956 = vsel %vm948, %v939, %v655
      %v957 = vsel %vm948, %v940, %v657
      %v958 = vsel %vm948, %v941, %v659
      %v959 = vsel %vm948, %v942, %v661
      %v960 = vsel %vm948, %v943, %v663
      %v961 = vsel %vm948, %v944, %v665
      %v962 = vsel %vm948, %v945, %v667
      %v963 = vsel %vm948, %v946, %v669
      %v964 = vsel %vm948, %v947, %v671
      %vm965 = vcmask 195584
      %v966 = vsel %vm965, %v949, %v705
      %v967 = vsel %vm965, %v950, %v707
      %v968 = vsel %vm965, %v951, %v709
      %v969 = vsel %vm965, %v952, %v711
      %v970 = vsel %vm965, %v953, %v713
      %v971 = vsel %vm965, %v954, %v715
      %v972 = vsel %vm965, %v955, %v717
      %v973 = vsel %vm965, %v956, %v719
      %v974 = vsel %vm965, %v957, %v721
      %v975 = vsel %vm965, %v958, %v723
      %v976 = vsel %vm965, %v959, %v725
      %v977 = vsel %vm965, %v960, %v727
      %v978 = vsel %vm965, %v961, %v729
      %v979 = vsel %vm965, %v962, %v731
      %v980 = vsel %vm965, %v963, %v733
      %v981 = vsel %vm965, %v964, %v735
      %vm982 = vcmask 228352
      %v983 = vsel %vm982, %v966, %v769
      %v984 = vsel %vm982, %v967, %v771
      %v985 = vsel %vm982, %v968, %v773
      %v986 = vsel %vm982, %v969, %v775
      %v987 = vsel %vm982, %v970, %v777
      %v988 = vsel %vm982, %v971, %v779
      %v989 = vsel %vm982, %v972, %v781
      %v990 = vsel %vm982, %v973, %v783
      %v991 = vsel %vm982, %v974, %v785
      %v992 = vsel %vm982, %v975, %v787
      %v993 = vsel %vm982, %v976, %v789
      %v994 = vsel %vm982, %v977, %v791
      %v995 = vsel %vm982, %v978, %v793
      %v996 = vsel %vm982, %v979, %v795
      %v997 = vsel %vm982, %v980, %v797
      %v998 = vsel %vm982, %v981, %v799
      %vm999 = vcmask 261120
      %v1000 = vsel %vm999, %v983, %v833
      %v1001 = vsel %vm999, %v984, %v835
      %v1002 = vsel %vm999, %v985, %v837
      %v1003 = vsel %vm999, %v986, %v839
      %v1004 = vsel %vm999, %v987, %v841
      %v1005 = vsel %vm999, %v988, %v843
      %v1006 = vsel %vm999, %v989, %v845
      %v1007 = vsel %vm999, %v990, %v847
      %v1008 = vsel %vm999, %v991, %v849
      %v1009 = vsel %vm999, %v992, %v851
      %v1010 = vsel %vm999, %v993, %v853
      %v1011 = vsel %vm999, %v994, %v855
      %v1012 = vsel %vm999, %v995, %v857
      %v1013 = vsel %vm999, %v996, %v859
      %v1014 = vsel %vm999, %v997, %v861
      %v1015 = vsel %vm999, %v998, %v863
      %vm1016 = vcmask 293888
      %v1017 = vsel %vm1016, %v1000, 0.0
      %v1018 = vsel %vm1016, %v1001, 0.0
      %v1019 = vsel %vm1016, %v1002, 0.0
      %v1020 = vsel %vm1016, %v1003, 0.0
      %v1021 = vsel %vm1016, %v1004, 0.0
      %v1022 = vsel %vm1016, %v1005, 0.0
      %v1023 = vsel %vm1016, %v1006, 0.0
      %v1024 = vsel %vm1016, %v1007, 0.0
      %v1025 = vsel %vm1016, %v1008, 0.0
      %v1026 = vsel %vm1016, %v1009, 0.0
      %v1027 = vsel %vm1016, %v1010, 0.0
      %v1028 = vsel %vm1016, %v1011, 0.0
      %v1029 = vsel %vm1016, %v1012, 0.0
      %v1030 = vsel %vm1016, %v1013, 0.0
      %v1031 = vsel %vm1016, %v1014, 0.0
      %v1032 = vsel %vm1016, %v1015, 0.0
      %v1033 = vld [vmem:[%s1] sm:$0xff]
      %v1034 = vld [vmem:[%s1 + $0x8] sm:$0xff]
      %v1035 = vld [vmem:[%s1 + $0x10] sm:$0xff]
      %v1036 = vld [vmem:[%s1 + $0x18] sm:$0xff]
      %v1037 = vld [vmem:[%s1 + $0x20] sm:$0xff]
      %v1038 = vld [vmem:[%s1 + $0x28] sm:$0xff]
      %v1039 = vld [vmem:[%s1 + $0x30] sm:$0xff]
      %v1040 = vld [vmem:[%s1 + $0x38] sm:$0xff]
      %v1041 = vld [vmem:[%s1 + $0x40] sm:$0xff]
      %v1042 = vld [vmem:[%s1 + $0x48] sm:$0xff]
      %v1043 = vld [vmem:[%s1 + $0x50] sm:$0xff]
      %v1044 = vld [vmem:[%s1 + $0x58] sm:$0xff]
      %v1045 = vld [vmem:[%s1 + $0x60] sm:$0xff]
      %v1046 = vld [vmem:[%s1 + $0x68] sm:$0xff]
      %v1047 = vld [vmem:[%s1 + $0x70] sm:$0xff]
      %v1048 = vld [vmem:[%s1 + $0x78] sm:$0xff]
      %1049 = vmatprep.subr.mxu0 0.0
      %1050 = vmatpush1.msra.mxu0 %v1048
      %1051 = vmatprep.subr.mxu0 0.0
      %1052 = vmatpush1.msra.mxu0 %v1047
      %1053 = vmatprep.subr.mxu0 0.0
      %1054 = vmatpush1.msra.mxu0 %v1046
      %1055 = vmatprep.subr.mxu0 0.0
      %1056 = vmatpush1.msra.mxu0 %v1045
      %1057 = vmatprep.subr.mxu0 0.0
      %1058 = vmatpush1.msra.mxu0 %v1044
      %1059 = vmatprep.subr.mxu0 0.0
      %1060 = vmatpush1.msra.mxu0 %v1043
      %1061 = vmatprep.subr.mxu0 0.0
      %1062 = vmatpush1.msra.mxu0 %v1042
      %1063 = vmatprep.subr.mxu0 0.0
      %1064 = vmatpush1.msra.mxu0 %v1041
      %1065 = vmatprep.subr.mxu0 0.0
      %1066 = vmatpush1.msra.mxu0 %v1040
      %1067 = vmatprep.subr.mxu0 0.0
      %1068 = vmatpush1.msra.mxu0 %v1039
      %1069 = vmatprep.subr.mxu0 0.0
      %1070 = vmatpush1.msra.mxu0 %v1038
      %1071 = vmatprep.subr.mxu0 0.0
      %1072 = vmatpush1.msra.mxu0 %v1037
      %1073 = vmatprep.subr.mxu0 0.0
      %1074 = vmatpush1.msra.mxu0 %v1036
      %1075 = vmatprep.subr.mxu0 0.0
      %1076 = vmatpush1.msra.mxu0 %v1035
      %1077 = vmatprep.subr.mxu0 0.0
      %1078 = vmatpush1.msra.mxu0 %v1034
      %1079 = vmatprep.subr.mxu0 0.0
      %1080 = vmatpush1.msra.mxu0 %v1033
      %1081 = vmatprep.subr.mxu0 0.0
      %1082 = vmatpush2.msra.mxu0 0.0
      %1083 = vmatprep.subr.mxu0 0.0
      %1084 = vmatpush2.msra.mxu0 0.0
      %1085 = vmatprep.subr.mxu0 0.0
      %1086 = vmatpush2.msra.mxu0 0.0
      %1087 = vmatprep.subr.mxu0 0.0
      %1088 = vmatpush2.msra.mxu0 0.0
      %1089 = vmatprep.subr.mxu0 0.0
      %1090 = vmatpush2.msra.mxu0 0.0
      %1091 = vmatprep.subr.mxu0 0.0
      %1092 = vmatpush2.msra.mxu0 0.0
      %1093 = vmatprep.subr.mxu0 0.0
      %1094 = vmatpush2.msra.mxu0 0.0
      %1095 = vmatprep.subr.mxu0 0.0
      %1096 = vmatpush2.msra.mxu0 0.0
      %1097 = vmatprep.subr.mxu0 0.0
      %1098 = vmatpush2.msra.mxu0 0.0
      %1099 = vmatprep.subr.mxu0 0.0
      %1100 = vmatpush2.msra.mxu0 0.0
      %1101 = vmatprep.subr.mxu0 0.0
      %1102 = vmatpush2.msra.mxu0 0.0
      %1103 = vmatprep.subr.mxu0 0.0
      %1104 = vmatpush2.msra.mxu0 0.0
      %1105 = vmatprep.subr.mxu0 0.0
      %1106 = vmatpush2.msra.mxu0 0.0
      %1107 = vmatprep.subr.mxu0 0.0
      %1108 = vmatpush2.msra.mxu0 0.0
      %1109 = vmatprep.subr.mxu0 0.0
      %1110 = vmatpush2.msra.mxu0 0.0
      %1111 = vmatprep.subr.mxu0 0.0
      %1112 = vmatpush2.msra.mxu0 0.0
      %1113 = vmatprep.mubr.f32.mxu0 0.0
      %1114 = vmatmul.mubr.f32.gmra.mxu0 %v1017
      %v1115 = vpop.f32.mrf.mxu0
      %v1116 = vadd.f32 0.0, %v1115
      %v1117 = vpop.f32.mrf.mxu0
      %1118 = vmatprep.mubr.f32.mxu0 0.0
      %1119 = vmatmul.mubr.f32.gmra.mxu0 %v1018
      %v1120 = vpop.f32.mrf.mxu0
      %v1121 = vadd.f32 0.0, %v1120
      %v1122 = vpop.f32.mrf.mxu0
      %1123 = vmatprep.mubr.f32.mxu0 0.0
      %1124 = vmatmul.mubr.f32.gmra.mxu0 %v1019
      %v1125 = vpop.f32.mrf.mxu0
      %v1126 = vadd.f32 0.0, %v1125
      %v1127 = vpop.f32.mrf.mxu0
      %1128 = vmatprep.mubr.f32.mxu0 0.0
      %1129 = vmatmul.mubr.f32.gmra.mxu0 %v1020
      %v1130 = vpop.f32.mrf.mxu0
      %v1131 = vadd.f32 0.0, %v1130
      %v1132 = vpop.f32.mrf.mxu0
      %1133 = vmatprep.mubr.f32.mxu0 0.0
      %1134 = vmatmul.mubr.f32.gmra.mxu0 %v1021
      %v1135 = vpop.f32.mrf.mxu0
      %v1136 = vadd.f32 0.0, %v1135
      %v1137 = vpop.f32.mrf.mxu0
      %1138 = vmatprep.mubr.f32.mxu0 0.0
      %1139 = vmatmul.mubr.f32.gmra.mxu0 %v1022
      %v1140 = vpop.f32.mrf.mxu0
      %v1141 = vadd.f32 0.0, %v1140
      %v1142 = vpop.f32.mrf.mxu0
      %1143 = vmatprep.mubr.f32.mxu0 0.0
      %1144 = vmatmul.mubr.f32.gmra.mxu0 %v1023
      %v1145 = vpop.f32.mrf.mxu0
      %v1146 = vadd.f32 0.0, %v1145
      %v1147 = vpop.f32.mrf.mxu0
      %1148 = vmatprep.mubr.f32.mxu0 0.0
      %1149 = vmatmul.mubr.f32.gmra.mxu0 %v1024
      %v1150 = vpop.f32.mrf.mxu0
      %v1151 = vadd.f32 0.0, %v1150
      %v1152 = vpop.f32.mrf.mxu0
      %1153 = vmatprep.mubr.f32.mxu0 0.0
      %1154 = vmatmul.mubr.f32.gmra.mxu0 %v1025
      %v1155 = vpop.f32.mrf.mxu0
      %v1156 = vadd.f32 0.0, %v1155
      %v1157 = vpop.f32.mrf.mxu0
      %1158 = vmatprep.mubr.f32.mxu0 0.0
      %1159 = vmatmul.mubr.f32.gmra.mxu0 %v1026
      %v1160 = vpop.f32.mrf.mxu0
      %v1161 = vadd.f32 0.0, %v1160
      %v1162 = vpop.f32.mrf.mxu0
      %1163 = vmatprep.mubr.f32.mxu0 0.0
      %1164 = vmatmul.mubr.f32.gmra.mxu0 %v1027
      %v1165 = vpop.f32.mrf.mxu0
      %v1166 = vadd.f32 0.0, %v1165
      %v1167 = vpop.f32.mrf.mxu0
      %1168 = vmatprep.mubr.f32.mxu0 0.0
      %1169 = vmatmul.mubr.f32.gmra.mxu0 %v1028
      %v1170 = vpop.f32.mrf.mxu0
      %v1171 = vadd.f32 0.0, %v1170
      %v1172 = vpop.f32.mrf.mxu0
      %1173 = vmatprep.mubr.f32.mxu0 0.0
      %1174 = vmatmul.mubr.f32.gmra.mxu0 %v1029
      %v1175 = vpop.f32.mrf.mxu0
      %v1176 = vadd.f32 0.0, %v1175
      %v1177 = vpop.f32.mrf.mxu0
      %1178 = vmatprep.mubr.f32.mxu0 0.0
      %1179 = vmatmul.mubr.f32.gmra.mxu0 %v1030
      %v1180 = vpop.f32.mrf.mxu0
      %v1181 = vadd.f32 0.0, %v1180
      %v1182 = vpop.f32.mrf.mxu0
      %1183 = vmatprep.mubr.f32.mxu0 0.0
      %1184 = vmatmul.mubr.f32.gmra.mxu0 %v1031
      %v1185 = vpop.f32.mrf.mxu0
      %v1186 = vadd.f32 0.0, %v1185
      %v1187 = vpop.f32.mrf.mxu0
      %1188 = vmatprep.mubr.f32.mxu0 0.0
      %1189 = vmatmul.mubr.f32.gmra.mxu0 %v1032
      %v1190 = vpop.f32.mrf.mxu0
      %v1191 = vadd.f32 0.0, %v1190
      %v1192 = vpop.f32.mrf.mxu0
      %1193 = vdwg.mxu0
      %1194 = vst [vmem:[%s205] sm:$0xff] %v1116
      %1195 = vst [vmem:[%s205 + $0x8] sm:$0xff] %v1121
      %1196 = vst [vmem:[%s205 + $0x10] sm:$0xff] %v1126
      %1197 = vst [vmem:[%s205 + $0x18] sm:$0xff] %v1131
      %1198 = vst [vmem:[%s205 + $0x20] sm:$0xff] %v1136
      %1199 = vst [vmem:[%s205 + $0x28] sm:$0xff] %v1141
      %1200 = vst [vmem:[%s205 + $0x30] sm:$0xff] %v1146
      %1201 = vst [vmem:[%s205 + $0x38] sm:$0xff] %v1151
      %1202 = vst [vmem:[%s205 + $0x40] sm:$0xff] %v1156
      %1203 = vst [vmem:[%s205 + $0x48] sm:$0xff] %v1161
      %1204 = vst [vmem:[%s205 + $0x50] sm:$0xff] %v1166
      %1205 = vst [vmem:[%s205 + $0x58] sm:$0xff] %v1171
      %1206 = vst [vmem:[%s205 + $0x60] sm:$0xff] %v1176
      %1207 = vst [vmem:[%s205 + $0x68] sm:$0xff] %v1181
      %1208 = vst [vmem:[%s205 + $0x70] sm:$0xff] %v1186
      %1209 = vst [vmem:[%s205 + $0x78] sm:$0xff] %v1191
      %v1210 = vadd.f32 %v1116, %v1121
      %v1211 = vadd.f32 %v1210, %v1126
      %v1212 = vadd.f32 %v1211, %v1131
      %v1213 = vadd.f32 %v1212, %v1136
      %v1214 = vadd.f32 %v1213, %v1141
      %v1215 = vadd.f32 %v1214, %v1146
      %v1216 = vadd.f32 %v1215, %v1151
      %v1217 = vadd.f32 %v1216, %v1156
      %v1218 = vadd.f32 %v1217, %v1161
      %v1219 = vadd.f32 %v1218, %v1166
      %v1220 = vadd.f32 %v1219, %v1171
      %v1221 = vadd.f32 %v1220, %v1176
      %v1222 = vadd.f32 %v1221, %v1181
      %v1223 = vadd.f32 %v1222, %v1186
      %v1224 = vadd.f32 %v1223, %v1191
      %v1225 = vrot.slane %v1224, 4
      %v1226 = vadd.f32 %v1224, %v1225
      %v1227 = vrot.slane %v1226, 2
      %v1228 = vadd.f32 %v1226, %v1227
      %v1229 = vrot.slane %v1228, 1
      %v1230 = vadd.f32 %v1228, %v1229
      %v1231 = vmul.f32 %v1116, %v1116
      %v1232 = vmul.f32 %v1121, %v1121
      %v1233 = vmul.f32 %v1126, %v1126
      %v1234 = vmul.f32 %v1131, %v1131
      %v1235 = vmul.f32 %v1136, %v1136
      %v1236 = vmul.f32 %v1141, %v1141
      %v1237 = vmul.f32 %v1146, %v1146
      %v1238 = vmul.f32 %v1151, %v1151
      %v1239 = vmul.f32 %v1156, %v1156
      %v1240 = vmul.f32 %v1161, %v1161
      %v1241 = vmul.f32 %v1166, %v1166
      %v1242 = vmul.f32 %v1171, %v1171
      %v1243 = vmul.f32 %v1176, %v1176
      %v1244 = vmul.f32 %v1181, %v1181
      %v1245 = vmul.f32 %v1186, %v1186
      %v1246 = vmul.f32 %v1191, %v1191
      %v1247 = vadd.f32 %v1231, %v1232
      %v1248 = vadd.f32 %v1247, %v1233
      %v1249 = vadd.f32 %v1248, %v1234
      %v1250 = vadd.f32 %v1249, %v1235
      %v1251 = vadd.f32 %v1250, %v1236
      %v1252 = vadd.f32 %v1251, %v1237
      %v1253 = vadd.f32 %v1252, %v1238
      %v1254 = vadd.f32 %v1253, %v1239
      %v1255 = vadd.f32 %v1254, %v1240
      %v1256 = vadd.f32 %v1255, %v1241
      %v1257 = vadd.f32 %v1256, %v1242
      %v1258 = vadd.f32 %v1257, %v1243
      %v1259 = vadd.f32 %v1258, %v1244
      %v1260 = vadd.f32 %v1259, %v1245
      %v1261 = vadd.f32 %v1260, %v1246
      %v1262 = vrot.slane %v1261, 4
      %v1263 = vadd.f32 %v1261, %v1262
      %v1264 = vrot.slane %v1263, 2
      %v1265 = vadd.f32 %v1263, %v1264
      %v1266 = vrot.slane %v1265, 1
      %v1267 = vadd.f32 %v1265, %v1266
      %vm1268 = vcmask 1040384
      %v1269 = vsel %vm1268, %v1230, %v1267
      %vm1270 = vcmask 1041408
      %v1271 = vsel %vm1270, %v1269, 0.0
      %1272 = vst [vmem:[%s214] sm:$0xff] %v1271
      %s1273 = smul.u32 16, %s20
      %p1274 = scmp.lt.s32.totalorder %s19, 1
      %s1275 = scalar_select %p1274, %s19, 1
      %p1276 = scmp.lt.s32.totalorder %s1273, 31
      %s1277 = scalar_select %p1276, %s1273, 31
      %s1278 = smul.addr %s1275, 32
      %s1279 = sadd.s32 %s1277, %s1278
      %s1280 = smul.addr %s1279, 8
      %s1281 = scalar_lea.vmem %s2, %s1280
      %p1282 = scmp.lt.s32.totalorder %s19, 1
      %s1283 = scalar_select %p1282, %s19, 1
      %p1284 = scmp.lt.s32.totalorder %s20, 1
      %s1285 = scalar_select %p1284, %s20, 1
      %s1286 = smul.addr %s1283, 2
      %s1287 = sadd.s32 %s1285, %s1286
      %s1288 = smul.addr %s1287, 8
      %s1289 = scalar_lea.vmem %s3, %s1288
      // Predicated region
      $region29: #{basic_conv2d.2} parent=27 // pred_check
        %p1290 = pneg %p94
      $region30: #{basic_conv2d.2} parent=27 // pred_check_branch
        %1292 = sbr.rel (%p1290) target = $region32
      $region31: #{basic_conv2d.2} parent=27 // pred_region
        %s1293 = smul.u32 16, %s20
      $region32: #{basic_conv2d.2} parent=27 // pred_fallthru
        _
      // Predicated region
      $region33: #{basic_conv2d.2} parent=27 // pred_check
        %p1294 = pneg %p122
      $region34: #{basic_conv2d.2} parent=27 // pred_check_branch
        %1296 = sbr.rel (%p1294) target = $region36
      $region35: #{basic_conv2d.2} parent=27 // pred_region
        _
      $region36: #{basic_conv2d.2} parent=27 // pred_fallthru
        _
    $region28: #{basic_conv2d.2} parent=5 // pred_fallthru
      _
    %p1297 = scmp.le.s32.totalorder 2, %s10
    // Predicated region
    $region37: #{basic_conv2d.2} parent=5 // pred_check
      %p1298 = pneg %p1297
    $region38: #{basic_conv2d.2} parent=5 // pred_check_branch
      %1300 = sbr.rel (%p1298) target = $region40
    $region39: #{basic_conv2d.2} parent=5 // pred_region
      %s1301 = ssub.s32 %s10, 2
      // Predicated region
      $region41: #{basic_conv2d.2} parent=39 // pred_check
        %p1302 = pneg %p100
      $region42: #{basic_conv2d.2} parent=39 // pred_check_branch
        %1304 = sbr.rel (%p1302) target = $region44
      $region43: #{basic_conv2d.2} parent=39 // pred_region
        %s1305 = smul.u32 16, %s22
        %p1306 = scmp.lt.s32.totalorder %s21, 1
        %s1307 = scalar_select %p1306, %s21, 1
        %p1308 = scmp.lt.s32.totalorder %s1305, 31
        %s1309 = scalar_select %p1308, %s1305, 31
        %s1310 = smul.addr %s1307, 32
        %s1311 = sadd.s32 %s1309, %s1310
        %s1312 = smul.addr %s1311, 8
        %s1313 = scalar_lea.vmem %s2, %s1312
      $region44: #{basic_conv2d.2} parent=39 // pred_fallthru
        _
      // Predicated region
      $region45: #{basic_conv2d.2} parent=39 // pred_check
        %p1314 = pneg %p128
      $region46: #{basic_conv2d.2} parent=39 // pred_check_branch
        %1316 = sbr.rel (%p1314) target = $region48
      $region47: #{basic_conv2d.2} parent=39 // pred_region
        %p1317 = scmp.lt.s32.totalorder %s21, 1
        %s1318 = scalar_select %p1317, %s21, 1
        %p1319 = scmp.lt.s32.totalorder %s22, 1
        %s1320 = scalar_select %p1319, %s22, 1
        %s1321 = smul.addr %s1318, 2
        %s1322 = sadd.s32 %s1320, %s1321
        %s1323 = smul.addr %s1322, 8
        %s1324 = scalar_lea.vmem %s3, %s1323
      $region48: #{basic_conv2d.2} parent=39 // pred_fallthru
        _
    $region40: #{basic_conv2d.2} parent=5 // pred_fallthru
      _
  $region6: #{basic_conv2d.2} parent=0 // loop_footer
    %s14 = sadd.s32 1, %s10
  $region7: #{basic_conv2d.2} parent=0 // loop_footer_branch
    %9 = sbr.rel target = $region3
  $region8: #{basic_conv2d.2} parent=0 // loop_exit
    _

</llo_original>
